<compile_context>
chip_gen: v6e
topology: v6e:2x2x1
jax: 0.10.0
libtpu: 0.0.40
codegen_flags: <defaults>
</compile_context>

<pallas_src>
import functools

import jax
import jax.numpy as jnp
from jax import lax
from jax.experimental import pallas as pl
from jax.experimental.pallas import tpu as pltpu

EPS = 1e-5
_PRE = 8          # zero-row prefix so every image interior starts 8-aligned


def _gap_rows(h):
    g = (-h) % 8
    return g if g else 8      # >=1 zero row between images, stride multiple of 8


# ----------------------------- Pallas kernel --------------------------------
def _residual_block_kernel(n, h, w, ch, use_conv, mm_dtype,
                           x_ref, w1b_ref, w2b_ref,
                           g1_ref, be1_ref, g2_ref, be2_ref, *rest):
    if use_conv:
        wskb_ref, bsk_ref, out_ref, xs_ref, ys_ref = rest
    else:
        out_ref, xs_ref, ys_ref = rest

    G = _gap_rows(h)
    HB = h + G                      # per-image row stride in the padded slabs
    Ms = _PRE + n * HB              # total slab rows
    L = w * ch                      # lane-dense output width
    inv_cnt = 1.0 / float(n * h * w)

    def init_gaps(ref):
        # Halo/gap rows must read as zeros.  Zero them once with aligned block
        # stores; interior rows are written exactly once later (never twice).
        width = ref.shape[1]
        ref[0:_PRE, :] = jnp.zeros((_PRE, width), jnp.float32)
        for i in range(n):
            g0 = _PRE + i * HB + h
            ref[g0:g0 + G, :] = jnp.zeros((G, width), jnp.float32)

    def conv3(src_ref, wb_ref):
        # 3x3 conv of ALL images at once: 3 deep matmuls over the stacked,
        # halo-padded slab against banded (block-Toeplitz) weights.  Rows at
        # image boundaries are junk and are masked out of the BN statistics.
        def mm(a, wq):
            return jnp.dot(a.astype(mm_dtype), wq,
                           preferred_element_type=jnp.float32)
        return (mm(src_ref[0:Ms - 2, :], wb_ref[0])
                + mm(src_ref[1:Ms - 1, :], wb_ref[1])
                + mm(src_ref[2:Ms, :], wb_ref[2]))          # (Ms-2, L) f32

    # Validity mask for conv-output row q (center slab position p = q+1).
    q = lax.broadcasted_iota(jnp.int32, (Ms - 2, 1), 0)
    valid = (q >= _PRE - 1) & (lax.rem(q - (_PRE - 1), HB) < h)
    maskf = jnp.where(valid, 1.0, 0.0)

    def lane_pool(rows):
        # Per-channel totals from lane-tiled (wpos, ch) partial sums via a
        # log2(W) circular lane-rotation tree (XLU slot, no MXU round trip).
        acc = rows
        s = ch
        while s < L:
            acc = acc + pltpu.roll(acc, shift=s, axis=1)
            s *= 2
        return acc

    def bn_coeffs(c, gamma, beta):
        # Single-pass training-mode BN: var = E[x^2] - E[x]^2 (biased).
        cm = c * maskf
        sums = jnp.sum(cm, axis=0, keepdims=True)
        sumsq = jnp.sum(cm * c, axis=0, keepdims=True)
        tot = lane_pool(jnp.concatenate([sums, sumsq], axis=0))   # (2, L)
        mean = tot[0:1, :] * inv_cnt
        var = tot[1:2, :] * inv_cnt - mean * mean
        scale = gamma * lax.rsqrt(var + EPS)
        shift = beta - mean * scale
        return scale, shift

    # --- build aligned, halo-padded input slab in VMEM (no HBM pad copy) ----
    init_gaps(xs_ref)
    for i in range(n):
        xs_ref[_PRE + i * HB:_PRE + i * HB + h, :] = x_ref[i * h:(i + 1) * h, :]

    # --- conv1 (bias cancelled by train-mode BN) + BN1 stats -----------------
    c1 = conv3(xs_ref, w1b_ref)
    scale1, shift1 = bn_coeffs(c1, g1_ref[...], be1_ref[...])

    # --- BN1 + ReLU fused into the (single, aligned) store of conv2's input --
    init_gaps(ys_ref)
    y1 = jnp.maximum(c1 * scale1 + shift1, 0.0)
    for i in range(n):
        src = _PRE - 1 + i * HB
        dst = _PRE + i * HB
        ys_ref[dst:dst + h, :] = y1[src:src + h, :]

    # --- conv2 (bias cancelled) + BN2 stats -----------------------------------
    c2 = conv3(ys_ref, w2b_ref)
    scale2, shift2 = bn_coeffs(c2, g2_ref[...], be2_ref[...])

    # --- skip path: one batched matmul (projection) or identity ---------------
    if use_conv:
        skip = jnp.dot(x_ref[...].astype(mm_dtype), wskb_ref[...],
                       preferred_element_type=jnp.float32) + bsk_ref[...]
    else:
        skip = x_ref[...]                       # requires Cin == Ch

    # --- BN2 + skip + ReLU, one aligned store per image ----------------------
    for i in range(n):
        src = _PRE - 1 + i * HB
        out_ref[i * h:(i + 1) * h, :] = jnp.maximum(
            c2[src:src + h, :] * scale2 + shift2 + skip[i * h:(i + 1) * h, :],
            0.0)


# ----------------------------- wrapper ---------------------------------------
def _banded_weights(wgt, w_spatial, dtype):
    """(3,3,Cin,Cout) conv weights -> (3, W*Cin, W*Cout) banded matrices.

    Entry [ky][(w_o+kx-1)*Cin + ci, w_o*Cout + co] = wgt[ky, kx, ci, co];
    the W-direction 'same' zero padding is absorbed by clipping the band.
    """
    mats = []
    for ky in range(3):
        m = None
        for kx in range(3):
            band = jnp.eye(w_spatial, k=1 - kx, dtype=jnp.float32)
            blk = jnp.kron(band, wgt[ky, kx])
            m = blk if m is None else m + blk
        mats.append(m)
    return jnp.stack(mats).astype(dtype)


def residual_block_pallas(x_nchw, params, use_conv, matmul_dtype=jnp.bfloat16):
    n, cin, h, w = x_nchw.shape
    ch = params["w1"].shape[-1]
    if not use_conv and cin != ch:
        raise ValueError(
            f"identity skip requires in_ch == hidden_ch (got {cin} vs {ch})")
    if w & (w - 1):
        # TODO(synk): non-power-of-two W needs a pool-matrix fallback for the
        # per-channel BN reduction.
        raise ValueError("W must be a power of two for lane-rotation pooling")

    L, Lin = w * ch, w * cin
    G = _gap_rows(h)
    Ms = _PRE + n * (h + G)

    # NCHW -> lane-dense (N*H, W*Cin) slab.  No H-halo padding in HBM — the
    # halos are created inside the kernel in VMEM.
    x_slab = jnp.transpose(x_nchw, (0, 2, 3, 1)).astype(jnp.float32)
    x_slab = x_slab.reshape(n * h, Lin)

    w1b = _banded_weights(params["w1"], w, matmul_dtype)      # (3, W*Cin, L)
    w2b = _banded_weights(params["w2"], w, matmul_dtype)      # (3, L, L)

    def tile_vec(v):                                          # (Ch,) -> (1, W*Ch)
        return jnp.tile(v.reshape(1, ch), (1, w)).astype(jnp.float32)

    # NOTE: conv biases b1/b2 are intentionally NOT passed — training-mode BN
    # cancels them exactly.
    args = [x_slab, w1b, w2b,
            tile_vec(params["g1"]), tile_vec(params["be1"]),
            tile_vec(params["g2"]), tile_vec(params["be2"])]
    if use_conv:
        wskb = jnp.kron(jnp.eye(w, dtype=jnp.float32),
                        params["wsk"]).astype(matmul_dtype)   # (W*Cin, L)
        args += [wskb, tile_vec(params["bsk"])]

    # VMEM budget derived from the shapes (not hard-coded), clamped to the
    # smallest per-core physical VMEM across generations (v7x: 64 MiB).
    wbytes = jnp.dtype(matmul_dtype).itemsize
    resident = 4 * (n * h * (Lin + L)          # x slab + output
                    + Ms * (Lin + L)           # xs / ys scratch
                    + 3 * Ms * L)              # live f32 conv values (c1/y1/c2)
    resident += wbytes * (3 * Lin * L + 3 * L * L + Lin * L)
    vmem_limit = int(min(64 * 2**20, max(16 * 2**20, 2 * resident)))

    vmem = pl.BlockSpec(memory_space=pltpu.MemorySpace.VMEM)
    out_slab = pl.pallas_call(
        functools.partial(_residual_block_kernel, n, h, w, ch, use_conv,
                          matmul_dtype),
        out_shape=jax.ShapeDtypeStruct((n * h, L), jnp.float32),
        in_specs=[vmem] * len(args),
        out_specs=vmem,
        scratch_shapes=[pltpu.VMEM((Ms, Lin), jnp.float32),
                        pltpu.VMEM((Ms, L), jnp.float32)],
        compiler_params=pltpu.CompilerParams(vmem_limit_bytes=vmem_limit),
    )(*args)

    # (N*H, W*Ch) slab -> NCHW
    return jnp.transpose(out_slab.reshape(n, h, w, ch), (0, 3, 1, 2))


# ------------------------- pure-JAX reference --------------------------------
def residual_block_ref(x_nchw, params, use_conv):
    x = jnp.transpose(x_nchw, (0, 2, 3, 1)).astype(jnp.float32)

    def conv(x, w, b):
        y = jax.lax.conv_general_dilated(
            x, w, window_strides=(1, 1), padding=((1, 1), (1, 1)),
            dimension_numbers=("NHWC", "HWIO", "NHWC"))
        return y + b.reshape(1, 1, 1, -1)

    def bn(y, g, b):
        m = jnp.mean(y, axis=(0, 1, 2), keepdims=True)
        v = jnp.mean((y - m) ** 2, axis=(0, 1, 2), keepdims=True)
        return ((y - m) * jax.lax.rsqrt(v + EPS) * g.reshape(1, 1, 1, -1)
                + b.reshape(1, 1, 1, -1))

    y = jax.nn.relu(bn(conv(x, params["w1"], params["b1"]),
                       params["g1"], params["be1"]))
    y = bn(conv(y, params["w2"], params["b2"]), params["g2"], params["be2"])
    if use_conv:
        skip = jax.lax.conv_general_dilated(
            x, params["wsk"].reshape(1, 1, *params["wsk"].shape),
            window_strides=(1, 1), padding=((0, 0), (0, 0)),
            dimension_numbers=("NHWC", "HWIO", "NHWC"))
        skip = skip + params["bsk"].reshape(1, 1, 1, -1)
    else:
        skip = x
    out = jax.nn.relu(y + skip)
    return jnp.transpose(out, (0, 3, 1, 2))


def make_params(key, in_ch, hidden_ch, use_conv):
    ks = jax.random.split(key, 6)
    p = {
        "w1": jax.random.normal(ks[0], (3, 3, in_ch, hidden_ch), jnp.float32) * 0.1,
        "b1": jax.random.normal(ks[1], (hidden_ch,), jnp.float32) * 0.1,
        "g1": jnp.ones((hidden_ch,), jnp.float32),
        "be1": jnp.zeros((hidden_ch,), jnp.float32),
        "w2": jax.random.normal(ks[2], (3, 3, hidden_ch, hidden_ch), jnp.float32) * 0.1,
        "b2": jax.random.normal(ks[3], (hidden_ch,), jnp.float32) * 0.1,
        "g2": jnp.ones((hidden_ch,), jnp.float32),
        "be2": jnp.zeros((hidden_ch,), jnp.float32),
    }
    if use_conv:
        p["wsk"] = jax.random.normal(ks[4], (in_ch, hidden_ch), jnp.float32) * 0.1
        p["bsk"] = jax.random.normal(ks[5], (hidden_ch,), jnp.float32) * 0.1
    return p


if __name__ == "__main__":
    key = jax.random.PRNGKey(0)
    k_x, k_p1, k_x2, k_p2 = jax.random.split(key, 4)

    # Case 1: projection skip (use_conv=True), in_ch != hidden_ch.
    x1 = jax.random.normal(k_x, (2, 4, 16, 16), jnp.float32)   # NCHW
    p1 = make_params(k_p1, in_ch=4, hidden_ch=8, use_conv=True)
    ref1 = residual_block_ref(x1, p1, use_conv=True)

    # f32 MXU operands: tight check of the algorithm.
    out1_f32 = jax.block_until_ready(
        residual_block_pallas(x1, p1, use_conv=True, matmul_dtype=jnp.float32))
    assert out1_f32.shape == (2, 8, 16, 16)
    assert jnp.allclose(out1_f32, ref1, atol=1e-3, rtol=1e-3)

    # bf16 MXU operands (perf-review default for v6e/v7x): looser tolerance.
    out1_bf16 = jax.block_until_ready(
        residual_block_pallas(x1, p1, use_conv=True, matmul_dtype=jnp.bfloat16))
    assert jnp.allclose(out1_bf16, ref1, atol=5e-2, rtol=5e-2)

    # Case 2: identity skip (use_conv=False), in_ch == hidden_ch.
    x2 = jax.random.normal(k_x2, (2, 8, 16, 16), jnp.float32)  # NCHW
    p2 = make_params(k_p2, in_ch=8, hidden_ch=8, use_conv=False)
    ref2 = residual_block_ref(x2, p2, use_conv=False)

    out2_f32 = jax.block_until_ready(
        residual_block_pallas(x2, p2, use_conv=False, matmul_dtype=jnp.float32))
    assert out2_f32.shape == (2, 8, 16, 16)
    assert jnp.allclose(out2_f32, ref2, atol=1e-3, rtol=1e-3)

    out2_bf16 = jax.block_until_ready(
        residual_block_pallas(x2, p2, use_conv=False, matmul_dtype=jnp.bfloat16))
    assert jnp.allclose(out2_bf16, ref2, atol=5e-2, rtol=5e-2)

    print("KERNEL_OK")
</pallas_src>

<mosaic_0001>
module attributes {stable_mosaic.version = 11 : i64} {
  func.func @_residual_block_kernel(%arg0: memref<32x64xf32, #tpu.memory_space<vmem>>, %arg1: memref<3x64x128xf32, #tpu.memory_space<vmem>>, %arg2: memref<3x128x128xf32, #tpu.memory_space<vmem>>, %arg3: memref<1x128xf32, #tpu.memory_space<vmem>>, %arg4: memref<1x128xf32, #tpu.memory_space<vmem>>, %arg5: memref<1x128xf32, #tpu.memory_space<vmem>>, %arg6: memref<1x128xf32, #tpu.memory_space<vmem>>, %arg7: memref<64x128xf32, #tpu.memory_space<vmem>>, %arg8: memref<1x128xf32, #tpu.memory_space<vmem>>, %arg9: memref<32x128xf32, #tpu.memory_space<vmem>>, %arg10: memref<56x64xf32, #tpu.memory_space<vmem>>, %arg11: memref<56x128xf32, #tpu.memory_space<vmem>>) attributes {dimension_semantics = [], scalar_prefetch = 0 : i64, scratch_operands = 2 : i64, tpu.core_type = #tpu.core_type<tc>} {
    %0 = tpu.iota {dimensions = array<i32: 0>} : vector<54x1xi32>
    %c7_i32 = arith.constant 7 : i32
    %1 = vector.broadcast %c7_i32 : i32 to vector<54x1xi32>
    %2 = arith.cmpi sge, %0, %1 : vector<54x1xi32>
    %c7_i32_0 = arith.constant 7 : i32
    %3 = vector.broadcast %c7_i32_0 : i32 to vector<54x1xi32>
    %4 = arith.subi %0, %3 : vector<54x1xi32>
    %c24_i32 = arith.constant 24 : i32
    %5 = vector.broadcast %c24_i32 : i32 to vector<54x1xi32>
    %6 = arith.remsi %4, %5 : vector<54x1xi32>
    %c16_i32 = arith.constant 16 : i32
    %7 = vector.broadcast %c16_i32 : i32 to vector<54x1xi32>
    %8 = arith.cmpi slt, %6, %7 : vector<54x1xi32>
    %9 = arith.andi %2, %8 : vector<54x1xi1>
    %cst = arith.constant 1.000000e+00 : f32
    %cst_1 = arith.constant 0.000000e+00 : f32
    %10 = vector.broadcast %cst : f32 to vector<54x1xf32>
    %11 = vector.broadcast %cst_1 : f32 to vector<54x1xf32>
    %12 = arith.select %9, %10, %11 : vector<54x1xi1>, vector<54x1xf32>
    %cst_2 = arith.constant 0.000000e+00 : f32
    %13 = vector.broadcast %cst_2 : f32 to vector<8x64xf32>
    %c0 = arith.constant 0 : index
    %c0_3 = arith.constant 0 : index
    %14 = vector.load %arg10[%c0, %c0_3] : memref<56x64xf32, #tpu.memory_space<vmem>>, vector<8x64xf32>
    tpu.vector_store %arg10[%c0, %c0_3], %13 {strides = array<i32>} : memref<56x64xf32, #tpu.memory_space<vmem>>, vector<8x64xf32>,
    %cst_4 = arith.constant 0.000000e+00 : f32
    %15 = vector.broadcast %cst_4 : f32 to vector<8x64xf32>
    %c24 = arith.constant 24 : index
    %c0_5 = arith.constant 0 : index
    %16 = vector.load %arg10[%c24, %c0_5] : memref<56x64xf32, #tpu.memory_space<vmem>>, vector<8x64xf32>
    tpu.vector_store %arg10[%c24, %c0_5], %15 {strides = array<i32>} : memref<56x64xf32, #tpu.memory_space<vmem>>, vector<8x64xf32>,
    %cst_6 = arith.constant 0.000000e+00 : f32
    %17 = vector.broadcast %cst_6 : f32 to vector<8x64xf32>
    %c48 = arith.constant 48 : index
    %c0_7 = arith.constant 0 : index
    %18 = vector.load %arg10[%c48, %c0_7] : memref<56x64xf32, #tpu.memory_space<vmem>>, vector<8x64xf32>
    tpu.vector_store %arg10[%c48, %c0_7], %17 {strides = array<i32>} : memref<56x64xf32, #tpu.memory_space<vmem>>, vector<8x64xf32>,
    %c0_8 = arith.constant 0 : index
    %c0_9 = arith.constant 0 : index
    %19 = vector.load %arg0[%c0_8, %c0_9] : memref<32x64xf32, #tpu.memory_space<vmem>>, vector<16x64xf32>
    %c8 = arith.constant 8 : index
    %c0_10 = arith.constant 0 : index
    %20 = vector.load %arg10[%c8, %c0_10] : memref<56x64xf32, #tpu.memory_space<vmem>>, vector<16x64xf32>
    tpu.vector_store %arg10[%c8, %c0_10], %19 {strides = array<i32>} : memref<56x64xf32, #tpu.memory_space<vmem>>, vector<16x64xf32>,
    %c16 = arith.constant 16 : index
    %c0_11 = arith.constant 0 : index
    %21 = vector.load %arg0[%c16, %c0_11] : memref<32x64xf32, #tpu.memory_space<vmem>>, vector<16x64xf32>
    %c32 = arith.constant 32 : index
    %c0_12 = arith.constant 0 : index
    %22 = vector.load %arg10[%c32, %c0_12] : memref<56x64xf32, #tpu.memory_space<vmem>>, vector<16x64xf32>
    tpu.vector_store %arg10[%c32, %c0_12], %21 {strides = array<i32>} : memref<56x64xf32, #tpu.memory_space<vmem>>, vector<16x64xf32>,
    %c0_13 = arith.constant 0 : index
    %c0_14 = arith.constant 0 : index
    %23 = vector.load %arg10[%c0_13, %c0_14] : memref<56x64xf32, #tpu.memory_space<vmem>>, vector<54x64xf32>
    %c0_15 = arith.constant 0 : index
    %c0_16 = arith.constant 0 : index
    %c0_17 = arith.constant 0 : index
    %24 = vector.load %arg1[%c0_15, %c0_16, %c0_17] : memref<3x64x128xf32, #tpu.memory_space<vmem>>, vector<1x64x128xf32>
    %25 = vector.shape_cast %24 : vector<1x64x128xf32> to vector<64x128xf32>
    %cst_18 = arith.constant dense<0.000000e+00> : vector<54x128xf32>
    %26 = tpu.matmul %23, %25, %cst_18 {dimension_numbers = #tpu.dot_dimension_numbers<[1], [0], [0], [1], [0, 0, 1, 1], [], []>} : vector<54x64xf32>, vector<64x128xf32>, vector<54x128xf32> -> vector<54x128xf32>
    %c1 = arith.constant 1 : index
    %c0_19 = arith.constant 0 : index
    %27 = vector.load %arg10[%c1, %c0_19] : memref<56x64xf32, #tpu.memory_space<vmem>>, vector<54x64xf32>
    %c1_20 = arith.constant 1 : index
    %c0_21 = arith.constant 0 : index
    %c0_22 = arith.constant 0 : index
    %28 = vector.load %arg1[%c1_20, %c0_21, %c0_22] : memref<3x64x128xf32, #tpu.memory_space<vmem>>, vector<1x64x128xf32>
    %29 = vector.shape_cast %28 : vector<1x64x128xf32> to vector<64x128xf32>
    %cst_23 = arith.constant dense<0.000000e+00> : vector<54x128xf32>
    %30 = tpu.matmul %27, %29, %cst_23 {dimension_numbers = #tpu.dot_dimension_numbers<[1], [0], [0], [1], [0, 0, 1, 1], [], []>} : vector<54x64xf32>, vector<64x128xf32>, vector<54x128xf32> -> vector<54x128xf32>
    %31 = arith.addf %26, %30 : vector<54x128xf32>
    %c2 = arith.constant 2 : index
    %c0_24 = arith.constant 0 : index
    %32 = vector.load %arg10[%c2, %c0_24] : memref<56x64xf32, #tpu.memory_space<vmem>>, vector<54x64xf32>
    %c2_25 = arith.constant 2 : index
    %c0_26 = arith.constant 0 : index
    %c0_27 = arith.constant 0 : index
    %33 = vector.load %arg1[%c2_25, %c0_26, %c0_27] : memref<3x64x128xf32, #tpu.memory_space<vmem>>, vector<1x64x128xf32>
    %34 = vector.shape_cast %33 : vector<1x64x128xf32> to vector<64x128xf32>
    %cst_28 = arith.constant dense<0.000000e+00> : vector<54x128xf32>
    %35 = tpu.matmul %32, %34, %cst_28 {dimension_numbers = #tpu.dot_dimension_numbers<[1], [0], [0], [1], [0, 0, 1, 1], [], []>} : vector<54x64xf32>, vector<64x128xf32>, vector<54x128xf32> -> vector<54x128xf32>
    %36 = arith.addf %31, %35 : vector<54x128xf32>
    %c0_29 = arith.constant 0 : index
    %c0_30 = arith.constant 0 : index
    %37 = vector.load %arg3[%c0_29, %c0_30] : memref<1x128xf32, #tpu.memory_space<vmem>>, vector<1x128xf32>
    %c0_31 = arith.constant 0 : index
    %c0_32 = arith.constant 0 : index
    %38 = vector.load %arg4[%c0_31, %c0_32] : memref<1x128xf32, #tpu.memory_space<vmem>>, vector<1x128xf32>
    %39 = vector.broadcast %12 : vector<54x1xf32> to vector<54x128xf32>
    %40 = arith.mulf %36, %39 : vector<54x128xf32>
    %cst_33 = arith.constant dense<0.000000e+00> : vector<128xf32>
    %41 = vector.multi_reduction <add>, %40, %cst_33 [0] : vector<54x128xf32> to vector<128xf32>
    %42 = vector.shape_cast %41 : vector<128xf32> to vector<1x128xf32>
    %43 = arith.mulf %40, %36 : vector<54x128xf32>
    %cst_34 = arith.constant dense<0.000000e+00> : vector<128xf32>
    %44 = vector.multi_reduction <add>, %43, %cst_34 [0] : vector<54x128xf32> to vector<128xf32>
    %45 = vector.shape_cast %44 : vector<128xf32> to vector<1x128xf32>
    %46 = tpu.concatenate %42, %45 in 0 : vector<1x128xf32>, vector<1x128xf32> -> vector<2x128xf32>
    %c8_i32 = arith.constant 8 : i32
    %47 = tpu.dynamic_rotate %46 by %c8_i32 dim 1 : vector<2x128xf32>, i32 -> vector<2x128xf32>
    %48 = arith.addf %46, %47 : vector<2x128xf32>
    %c16_i32_35 = arith.constant 16 : i32
    %49 = tpu.dynamic_rotate %48 by %c16_i32_35 dim 1 : vector<2x128xf32>, i32 -> vector<2x128xf32>
    %50 = arith.addf %48, %49 : vector<2x128xf32>
    %c32_i32 = arith.constant 32 : i32
    %51 = tpu.dynamic_rotate %50 by %c32_i32 dim 1 : vector<2x128xf32>, i32 -> vector<2x128xf32>
    %52 = arith.addf %50, %51 : vector<2x128xf32>
    %c64_i32 = arith.constant 64 : i32
    %53 = tpu.dynamic_rotate %52 by %c64_i32 dim 1 : vector<2x128xf32>, i32 -> vector<2x128xf32>
    %54 = arith.addf %52, %53 : vector<2x128xf32>
    %55 = vector.extract_strided_slice %54 {offsets = [0, 0], sizes = [1, 128], strides = [1, 1]} : vector<2x128xf32> to vector<1x128xf32>
    %cst_36 = arith.constant 0.001953125 : f32
    %56 = vector.broadcast %cst_36 : f32 to vector<1x128xf32>
    %57 = arith.mulf %55, %56 : vector<1x128xf32>
    %58 = vector.extract_strided_slice %54 {offsets = [1, 0], sizes = [1, 128], strides = [1, 1]} : vector<2x128xf32> to vector<1x128xf32>
    %cst_37 = arith.constant 0.001953125 : f32
    %59 = vector.broadcast %cst_37 : f32 to vector<1x128xf32>
    %60 = arith.mulf %58, %59 : vector<1x128xf32>
    %61 = arith.mulf %57, %57 : vector<1x128xf32>
    %62 = arith.subf %60, %61 : vector<1x128xf32>
    %cst_38 = arith.constant 9.99999974E-6 : f32
    %63 = vector.broadcast %cst_38 : f32 to vector<1x128xf32>
    %64 = arith.addf %62, %63 : vector<1x128xf32>
    %65 = math.rsqrt %64 : vector<1x128xf32>
    %66 = arith.mulf %37, %65 : vector<1x128xf32>
    %67 = arith.mulf %57, %66 : vector<1x128xf32>
    %68 = arith.subf %38, %67 : vector<1x128xf32>
    %cst_39 = arith.constant 0.000000e+00 : f32
    %69 = vector.broadcast %cst_39 : f32 to vector<8x128xf32>
    %c0_40 = arith.constant 0 : index
    %c0_41 = arith.constant 0 : index
    %70 = vector.load %arg11[%c0_40, %c0_41] : memref<56x128xf32, #tpu.memory_space<vmem>>, vector<8x128xf32>
    tpu.vector_store %arg11[%c0_40, %c0_41], %69 {strides = array<i32>} : memref<56x128xf32, #tpu.memory_space<vmem>>, vector<8x128xf32>,
    %cst_42 = arith.constant 0.000000e+00 : f32
    %71 = vector.broadcast %cst_42 : f32 to vector<8x128xf32>
    %c24_43 = arith.constant 24 : index
    %c0_44 = arith.constant 0 : index
    %72 = vector.load %arg11[%c24_43, %c0_44] : memref<56x128xf32, #tpu.memory_space<vmem>>, vector<8x128xf32>
    tpu.vector_store %arg11[%c24_43, %c0_44], %71 {strides = array<i32>} : memref<56x128xf32, #tpu.memory_space<vmem>>, vector<8x128xf32>,
    %cst_45 = arith.constant 0.000000e+00 : f32
    %73 = vector.broadcast %cst_45 : f32 to vector<8x128xf32>
    %c48_46 = arith.constant 48 : index
    %c0_47 = arith.constant 0 : index
    %74 = vector.load %arg11[%c48_46, %c0_47] : memref<56x128xf32, #tpu.memory_space<vmem>>, vector<8x128xf32>
    tpu.vector_store %arg11[%c48_46, %c0_47], %73 {strides = array<i32>} : memref<56x128xf32, #tpu.memory_space<vmem>>, vector<8x128xf32>,
    %75 = vector.broadcast %66 : vector<1x128xf32> to vector<54x128xf32>
    %76 = arith.mulf %36, %75 : vector<54x128xf32>
    %77 = vector.broadcast %68 : vector<1x128xf32> to vector<54x128xf32>
    %78 = arith.addf %76, %77 : vector<54x128xf32>
    %cst_48 = arith.constant 0.000000e+00 : f32
    %79 = vector.broadcast %cst_48 : f32 to vector<54x128xf32>
    %80 = arith.maximumf %78, %79 : vector<54x128xf32>
    %81 = vector.extract_strided_slice %80 {offsets = [7, 0], sizes = [16, 128], strides = [1, 1]} : vector<54x128xf32> to vector<16x128xf32>
    %c8_49 = arith.constant 8 : index
    %c0_50 = arith.constant 0 : index
    %82 = vector.load %arg11[%c8_49, %c0_50] : memref<56x128xf32, #tpu.memory_space<vmem>>, vector<16x128xf32>
    tpu.vector_store %arg11[%c8_49, %c0_50], %81 {strides = array<i32>} : memref<56x128xf32, #tpu.memory_space<vmem>>, vector<16x128xf32>,
    %83 = vector.extract_strided_slice %80 {offsets = [31, 0], sizes = [16, 128], strides = [1, 1]} : vector<54x128xf32> to vector<16x128xf32>
    %c32_51 = arith.constant 32 : index
    %c0_52 = arith.constant 0 : index
    %84 = vector.load %arg11[%c32_51, %c0_52] : memref<56x128xf32, #tpu.memory_space<vmem>>, vector<16x128xf32>
    tpu.vector_store %arg11[%c32_51, %c0_52], %83 {strides = array<i32>} : memref<56x128xf32, #tpu.memory_space<vmem>>, vector<16x128xf32>,
    %c0_53 = arith.constant 0 : index
    %c0_54 = arith.constant 0 : index
    %85 = vector.load %arg11[%c0_53, %c0_54] : memref<56x128xf32, #tpu.memory_space<vmem>>, vector<54x128xf32>
    %c0_55 = arith.constant 0 : index
    %c0_56 = arith.constant 0 : index
    %c0_57 = arith.constant 0 : index
    %86 = vector.load %arg2[%c0_55, %c0_56, %c0_57] : memref<3x128x128xf32, #tpu.memory_space<vmem>>, vector<1x128x128xf32>
    %87 = vector.shape_cast %86 : vector<1x128x128xf32> to vector<128x128xf32>
    %cst_58 = arith.constant dense<0.000000e+00> : vector<54x128xf32>
    %88 = tpu.matmul %85, %87, %cst_58 {dimension_numbers = #tpu.dot_dimension_numbers<[1], [0], [0], [1], [0, 0, 1, 1], [], []>} : vector<54x128xf32>, vector<128x128xf32>, vector<54x128xf32> -> vector<54x128xf32>
    %c1_59 = arith.constant 1 : index
    %c0_60 = arith.constant 0 : index
    %89 = vector.load %arg11[%c1_59, %c0_60] : memref<56x128xf32, #tpu.memory_space<vmem>>, vector<54x128xf32>
    %c1_61 = arith.constant 1 : index
    %c0_62 = arith.constant 0 : index
    %c0_63 = arith.constant 0 : index
    %90 = vector.load %arg2[%c1_61, %c0_62, %c0_63] : memref<3x128x128xf32, #tpu.memory_space<vmem>>, vector<1x128x128xf32>
    %91 = vector.shape_cast %90 : vector<1x128x128xf32> to vector<128x128xf32>
    %cst_64 = arith.constant dense<0.000000e+00> : vector<54x128xf32>
    %92 = tpu.matmul %89, %91, %cst_64 {dimension_numbers = #tpu.dot_dimension_numbers<[1], [0], [0], [1], [0, 0, 1, 1], [], []>} : vector<54x128xf32>, vector<128x128xf32>, vector<54x128xf32> -> vector<54x128xf32>
    %93 = arith.addf %88, %92 : vector<54x128xf32>
    %c2_65 = arith.constant 2 : index
    %c0_66 = arith.constant 0 : index
    %94 = vector.load %arg11[%c2_65, %c0_66] : memref<56x128xf32, #tpu.memory_space<vmem>>, vector<54x128xf32>
    %c2_67 = arith.constant 2 : index
    %c0_68 = arith.constant 0 : index
    %c0_69 = arith.constant 0 : index
    %95 = vector.load %arg2[%c2_67, %c0_68, %c0_69] : memref<3x128x128xf32, #tpu.memory_space<vmem>>, vector<1x128x128xf32>
    %96 = vector.shape_cast %95 : vector<1x128x128xf32> to vector<128x128xf32>
    %cst_70 = arith.constant dense<0.000000e+00> : vector<54x128xf32>
    %97 = tpu.matmul %94, %96, %cst_70 {dimension_numbers = #tpu.dot_dimension_numbers<[1], [0], [0], [1], [0, 0, 1, 1], [], []>} : vector<54x128xf32>, vector<128x128xf32>, vector<54x128xf32> -> vector<54x128xf32>
    %98 = arith.addf %93, %97 : vector<54x128xf32>
    %c0_71 = arith.constant 0 : index
    %c0_72 = arith.constant 0 : index
    %99 = vector.load %arg5[%c0_71, %c0_72] : memref<1x128xf32, #tpu.memory_space<vmem>>, vector<1x128xf32>
    %c0_73 = arith.constant 0 : index
    %c0_74 = arith.constant 0 : index
    %100 = vector.load %arg6[%c0_73, %c0_74] : memref<1x128xf32, #tpu.memory_space<vmem>>, vector<1x128xf32>
    %101 = vector.broadcast %12 : vector<54x1xf32> to vector<54x128xf32>
    %102 = arith.mulf %98, %101 : vector<54x128xf32>
    %cst_75 = arith.constant dense<0.000000e+00> : vector<128xf32>
    %103 = vector.multi_reduction <add>, %102, %cst_75 [0] : vector<54x128xf32> to vector<128xf32>
    %104 = vector.shape_cast %103 : vector<128xf32> to vector<1x128xf32>
    %105 = arith.mulf %102, %98 : vector<54x128xf32>
    %cst_76 = arith.constant dense<0.000000e+00> : vector<128xf32>
    %106 = vector.multi_reduction <add>, %105, %cst_76 [0] : vector<54x128xf32> to vector<128xf32>
    %107 = vector.shape_cast %106 : vector<128xf32> to vector<1x128xf32>
    %108 = tpu.concatenate %104, %107 in 0 : vector<1x128xf32>, vector<1x128xf32> -> vector<2x128xf32>
    %c8_i32_77 = arith.constant 8 : i32
    %109 = tpu.dynamic_rotate %108 by %c8_i32_77 dim 1 : vector<2x128xf32>, i32 -> vector<2x128xf32>
    %110 = arith.addf %108, %109 : vector<2x128xf32>
    %c16_i32_78 = arith.constant 16 : i32
    %111 = tpu.dynamic_rotate %110 by %c16_i32_78 dim 1 : vector<2x128xf32>, i32 -> vector<2x128xf32>
    %112 = arith.addf %110, %111 : vector<2x128xf32>
    %c32_i32_79 = arith.constant 32 : i32
    %113 = tpu.dynamic_rotate %112 by %c32_i32_79 dim 1 : vector<2x128xf32>, i32 -> vector<2x128xf32>
    %114 = arith.addf %112, %113 : vector<2x128xf32>
    %c64_i32_80 = arith.constant 64 : i32
    %115 = tpu.dynamic_rotate %114 by %c64_i32_80 dim 1 : vector<2x128xf32>, i32 -> vector<2x128xf32>
    %116 = arith.addf %114, %115 : vector<2x128xf32>
    %117 = vector.extract_strided_slice %116 {offsets = [0, 0], sizes = [1, 128], strides = [1, 1]} : vector<2x128xf32> to vector<1x128xf32>
    %cst_81 = arith.constant 0.001953125 : f32
    %118 = vector.broadcast %cst_81 : f32 to vector<1x128xf32>
    %119 = arith.mulf %117, %118 : vector<1x128xf32>
    %120 = vector.extract_strided_slice %116 {offsets = [1, 0], sizes = [1, 128], strides = [1, 1]} : vector<2x128xf32> to vector<1x128xf32>
    %cst_82 = arith.constant 0.001953125 : f32
    %121 = vector.broadcast %cst_82 : f32 to vector<1x128xf32>
    %122 = arith.mulf %120, %121 : vector<1x128xf32>
    %123 = arith.mulf %119, %119 : vector<1x128xf32>
    %124 = arith.subf %122, %123 : vector<1x128xf32>
    %cst_83 = arith.constant 9.99999974E-6 : f32
    %125 = vector.broadcast %cst_83 : f32 to vector<1x128xf32>
    %126 = arith.addf %124, %125 : vector<1x128xf32>
    %127 = math.rsqrt %126 : vector<1x128xf32>
    %128 = arith.mulf %99, %127 : vector<1x128xf32>
    %129 = arith.mulf %119, %128 : vector<1x128xf32>
    %130 = arith.subf %100, %129 : vector<1x128xf32>
    %c0_84 = arith.constant 0 : index
    %c0_85 = arith.constant 0 : index
    %131 = vector.load %arg0[%c0_84, %c0_85] : memref<32x64xf32, #tpu.memory_space<vmem>>, vector<32x64xf32>
    %c0_86 = arith.constant 0 : index
    %c0_87 = arith.constant 0 : index
    %132 = vector.load %arg7[%c0_86, %c0_87] : memref<64x128xf32, #tpu.memory_space<vmem>>, vector<64x128xf32>
    %cst_88 = arith.constant dense<0.000000e+00> : vector<32x128xf32>
    %133 = tpu.matmul %131, %132, %cst_88 {dimension_numbers = #tpu.dot_dimension_numbers<[1], [0], [0], [1], [0, 0, 1, 1], [], []>} : vector<32x64xf32>, vector<64x128xf32>, vector<32x128xf32> -> vector<32x128xf32>
    %c0_89 = arith.constant 0 : index
    %c0_90 = arith.constant 0 : index
    %134 = vector.load %arg8[%c0_89, %c0_90] : memref<1x128xf32, #tpu.memory_space<vmem>>, vector<1x128xf32>
    %135 = vector.broadcast %134 : vector<1x128xf32> to vector<32x128xf32>
    %136 = arith.addf %133, %135 : vector<32x128xf32>
    %137 = vector.extract_strided_slice %98 {offsets = [7, 0], sizes = [16, 128], strides = [1, 1]} : vector<54x128xf32> to vector<16x128xf32>
    %138 = vector.broadcast %128 : vector<1x128xf32> to vector<16x128xf32>
    %139 = arith.mulf %137, %138 : vector<16x128xf32>
    %140 = vector.broadcast %130 : vector<1x128xf32> to vector<16x128xf32>
    %141 = arith.addf %139, %140 : vector<16x128xf32>
    %142 = vector.extract_strided_slice %136 {offsets = [0, 0], sizes = [16, 128], strides = [1, 1]} : vector<32x128xf32> to vector<16x128xf32>
    %143 = arith.addf %141, %142 : vector<16x128xf32>
    %cst_91 = arith.constant 0.000000e+00 : f32
    %144 = vector.broadcast %cst_91 : f32 to vector<16x128xf32>
    %145 = arith.maximumf %143, %144 : vector<16x128xf32>
    %c0_92 = arith.constant 0 : index
    %c0_93 = arith.constant 0 : index
    %146 = vector.load %arg9[%c0_92, %c0_93] : memref<32x128xf32, #tpu.memory_space<vmem>>, vector<16x128xf32>
    tpu.vector_store %arg9[%c0_92, %c0_93], %145 {strides = array<i32>} : memref<32x128xf32, #tpu.memory_space<vmem>>, vector<16x128xf32>,
    %147 = vector.extract_strided_slice %98 {offsets = [31, 0], sizes = [16, 128], strides = [1, 1]} : vector<54x128xf32> to vector<16x128xf32>
    %148 = vector.broadcast %128 : vector<1x128xf32> to vector<16x128xf32>
    %149 = arith.mulf %147, %148 : vector<16x128xf32>
    %150 = vector.broadcast %130 : vector<1x128xf32> to vector<16x128xf32>
    %151 = arith.addf %149, %150 : vector<16x128xf32>
    %152 = vector.extract_strided_slice %136 {offsets = [16, 0], sizes = [16, 128], strides = [1, 1]} : vector<32x128xf32> to vector<16x128xf32>
    %153 = arith.addf %151, %152 : vector<16x128xf32>
    %cst_94 = arith.constant 0.000000e+00 : f32
    %154 = vector.broadcast %cst_94 : f32 to vector<16x128xf32>
    %155 = arith.maximumf %153, %154 : vector<16x128xf32>
    %c16_95 = arith.constant 16 : index
    %c0_96 = arith.constant 0 : index
    %156 = vector.load %arg9[%c16_95, %c0_96] : memref<32x128xf32, #tpu.memory_space<vmem>>, vector<16x128xf32>
    tpu.vector_store %arg9[%c16_95, %c0_96], %155 {strides = array<i32>} : memref<32x128xf32, #tpu.memory_space<vmem>>, vector<16x128xf32>,
    return
  }
}

</mosaic_0001>

<llo_original>
// kernel: tpu_custom_call.1
$region0: #{tpu_custom_call.1}
  #allocation0 [shape = 'u32[]', space=smem, size = 0x4, offset = 0x4, fixed_abs, tag = 'smem constant byte address 0x4 - core index']
  #allocation1 [shape = 'u32[144,128]{1,0:T(1,128)}', space=vmem, size = 0x12000, scoped, tag = 'internal scratch']
  #allocation2 [shape = 'f32[56,64]{1,0:T(8,128)}', space=vmem, size = 0x7000, scoped, tag = 'scratch operand']
  #allocation3 [shape = 'f32[56,128]{1,0:T(8,128)}', space=vmem, size = 0x7000, scoped, tag = 'scratch operand']
  %s0 = inlined_call_operand.hbm [shape: f32[32,64], index: 0, kind: input, shape index: {}]
  %s1 = inlined_call_operand.hbm [shape: f32[3,64,128], index: 1, kind: input, shape index: {}]
  %s2 = inlined_call_operand.hbm [shape: f32[3,128,128], index: 2, kind: input, shape index: {}]
  %s3 = inlined_call_operand.vmem [shape: f32[1,128], index: 3, kind: input, shape index: {}]
  %s4 = inlined_call_operand.vmem [shape: f32[1,128], index: 4, kind: input, shape index: {}]
  %s5 = inlined_call_operand.vmem [shape: f32[1,128], index: 5, kind: input, shape index: {}]
  %s6 = inlined_call_operand.vmem [shape: f32[1,128], index: 6, kind: input, shape index: {}]
  %s7 = inlined_call_operand.hbm [shape: f32[64,128], index: 7, kind: input, shape index: {}]
  %s8 = inlined_call_operand.vmem [shape: f32[1,128], index: 8, kind: input, shape index: {}]
  %s9 = inlined_call_operand.hbm [shape: f32[32,128], index: 9, kind: output, shape index: {}]
  %s10 = sld [smem:[#allocation0]]
  $region62: #{tpu_custom_call.1} parent=0
    _
  %s12 = ssub.s32 1, %s10
  %s13 = scalar_select 0, %s12, %s10
  $region1: #{tpu_custom_call.1} parent=0
    #allocation4 [shape = 'u8[16384]{0}', space=vmem, size = 0x4000, scoped, tag = 'input window, operand 0, single buffered']
    #allocation5 [shape = 's32[1]{0}', space=sflag, size = 0x4, scoped, tag = 'scoped memory for tpu_custom_call.1']
    #allocation6 [shape = 's32[1]{0}', space=sflag, size = 0x4, scoped, tag = 'scoped memory for tpu_custom_call.1']
    #allocation7 [shape = 'u8[98304]{0}', space=vmem, size = 0x18000, scoped, tag = 'input window, operand 1, single buffered']
    #allocation8 [shape = 's32[1]{0}', space=sflag, size = 0x4, scoped, tag = 'scoped memory for tpu_custom_call.1']
    #allocation9 [shape = 'u8[196608]{0}', space=vmem, size = 0x30000, scoped, tag = 'input window, operand 2, single buffered']
    #allocation10 [shape = 'u8[32768]{0}', space=vmem, size = 0x8000, scoped, tag = 'input window, operand 7, single buffered']
    #allocation11 [shape = 's32[1]{0}', space=sflag, size = 0x4, scoped, tag = 'scoped memory for tpu_custom_call.1']
    #allocation12 [shape = 'u8[16384]{0}', space=vmem, size = 0x4000, scoped, tag = 'output window, operand 0, single buffered']
    %14 = vsyncpa [#allocation5], 0
    %15 = vsyncpa [#allocation8], 0
    %16 = vsyncpa [#allocation11], 0
    %17 = vsyncpa [#allocation6], 0
    // Predicated region
    $region2: #{tpu_custom_call.1} parent=1 // pred_check
      _
    $region3: #{tpu_custom_call.1} parent=1 // pred_check_branch
      %19 = sbr.rel (0) target = $region5
    $region4: #{tpu_custom_call.1} parent=1 // pred_region
      %s21 = ssub.s32 512, 512
      %22 = vsyncadd [#allocation5], %s21
      %s23 = sshll.u32 [#allocation4], 4
      %s24 = int_to_ptr.vmem [resolvable:$true] %s23
      %29 = dma.hbm_to_vmem [thread:$0]  %s0, 512, %s24, [#allocation5], 128, 128, 8
    $region5: #{tpu_custom_call.1} parent=1 // pred_fallthru
      _
    // Predicated region
    $region6: #{tpu_custom_call.1} parent=1 // pred_check
      _
    $region7: #{tpu_custom_call.1} parent=1 // pred_check_branch
      %31 = sbr.rel (0) target = $region9
    $region8: #{tpu_custom_call.1} parent=1 // pred_region
      %s33 = ssub.s32 3072, 3072
      %34 = vsyncadd [#allocation8], %s33
      %s35 = sshll.u32 [#allocation7], 4
      %s36 = int_to_ptr.vmem [resolvable:$true] %s35
      %41 = dma.hbm_to_vmem [thread:$0]  %s1, 3072, %s36, [#allocation8], 128, 128, 8
    $region9: #{tpu_custom_call.1} parent=1 // pred_fallthru
      _
    // Predicated region
    $region10: #{tpu_custom_call.1} parent=1 // pred_check
      _
    $region11: #{tpu_custom_call.1} parent=1 // pred_check_branch
      %43 = sbr.rel (0) target = $region13
    $region12: #{tpu_custom_call.1} parent=1 // pred_region
      %s45 = ssub.s32 6144, 6144
      %46 = vsyncadd [#allocation8], %s45
      %s47 = sshll.u32 [#allocation9], 4
      %s48 = int_to_ptr.vmem [resolvable:$true] %s47
      %53 = dma.hbm_to_vmem [thread:$0]  %s2, 6144, %s48, [#allocation8], 128, 128, 8
    $region13: #{tpu_custom_call.1} parent=1 // pred_fallthru
      _
    // Predicated region
    $region14: #{tpu_custom_call.1} parent=1 // pred_check
      _
    $region15: #{tpu_custom_call.1} parent=1 // pred_check_branch
      %55 = sbr.rel (0) target = $region17
    $region16: #{tpu_custom_call.1} parent=1 // pred_region
      _
    $region17: #{tpu_custom_call.1} parent=1 // pred_fallthru
      _
    // Predicated region
    $region18: #{tpu_custom_call.1} parent=1 // pred_check
      _
    $region19: #{tpu_custom_call.1} parent=1 // pred_check_branch
      %57 = sbr.rel (0) target = $region21
    $region20: #{tpu_custom_call.1} parent=1 // pred_region
      _
    $region21: #{tpu_custom_call.1} parent=1 // pred_fallthru
      _
    // Predicated region
    $region22: #{tpu_custom_call.1} parent=1 // pred_check
      _
    $region23: #{tpu_custom_call.1} parent=1 // pred_check_branch
      %59 = sbr.rel (0) target = $region25
    $region24: #{tpu_custom_call.1} parent=1 // pred_region
      _
    $region25: #{tpu_custom_call.1} parent=1 // pred_fallthru
      _
    // Predicated region
    $region26: #{tpu_custom_call.1} parent=1 // pred_check
      _
    $region27: #{tpu_custom_call.1} parent=1 // pred_check_branch
      %61 = sbr.rel (0) target = $region29
    $region28: #{tpu_custom_call.1} parent=1 // pred_region
      _
    $region29: #{tpu_custom_call.1} parent=1 // pred_fallthru
      _
    // Predicated region
    $region30: #{tpu_custom_call.1} parent=1 // pred_check
      _
    $region31: #{tpu_custom_call.1} parent=1 // pred_check_branch
      %63 = sbr.rel (0) target = $region33
    $region32: #{tpu_custom_call.1} parent=1 // pred_region
      %s65 = ssub.s32 1024, 1024
      %66 = vsyncadd [#allocation11], %s65
      %s67 = sshll.u32 [#allocation10], 4
      %s68 = int_to_ptr.vmem [resolvable:$true] %s67
      %73 = dma.hbm_to_vmem [thread:$0]  %s7, 1024, %s68, [#allocation11], 128, 128, 8
    $region33: #{tpu_custom_call.1} parent=1 // pred_fallthru
      _
    // Predicated region
    $region34: #{tpu_custom_call.1} parent=1 // pred_check
      _
    $region35: #{tpu_custom_call.1} parent=1 // pred_check_branch
      %75 = sbr.rel (0) target = $region37
    $region36: #{tpu_custom_call.1} parent=1 // pred_region
      _
    $region37: #{tpu_custom_call.1} parent=1 // pred_fallthru
      _
    // Predicated region
    $region38: #{tpu_custom_call.1} parent=1 // pred_check
      _
    $region39: #{tpu_custom_call.1} parent=1 // pred_check_branch
      %77 = sbr.rel (0) target = $region41
    $region40: #{tpu_custom_call.1} parent=1 // pred_region
      %78 = dma.done [#allocation5], 512
    $region41: #{tpu_custom_call.1} parent=1 // pred_fallthru
      _
    // Predicated region
    $region42: #{tpu_custom_call.1} parent=1 // pred_check
      _
    $region43: #{tpu_custom_call.1} parent=1 // pred_check_branch
      %80 = sbr.rel (0) target = $region45
    $region44: #{tpu_custom_call.1} parent=1 // pred_region
      %81 = dma.done [#allocation8], 3072
    $region45: #{tpu_custom_call.1} parent=1 // pred_fallthru
      _
    // Predicated region
    $region46: #{tpu_custom_call.1} parent=1 // pred_check
      _
    $region47: #{tpu_custom_call.1} parent=1 // pred_check_branch
      %83 = sbr.rel (0) target = $region49
    $region48: #{tpu_custom_call.1} parent=1 // pred_region
      %84 = dma.done [#allocation8], 6144
    $region49: #{tpu_custom_call.1} parent=1 // pred_fallthru
      _
    // Predicated region
    $region50: #{tpu_custom_call.1} parent=1 // pred_check
      _
    $region51: #{tpu_custom_call.1} parent=1 // pred_check_branch
      %86 = sbr.rel (0) target = $region53
    $region52: #{tpu_custom_call.1} parent=1 // pred_region
      %87 = dma.done [#allocation11], 1024
    $region53: #{tpu_custom_call.1} parent=1 // pred_fallthru
      _
    %v88 = vlaneseq
    %v89 = vshrl.u32 %v88, 7
    %v90 = vadd.s32 %v89, 8
    %v91 = vadd.s32 %v89, 16
    %v92 = vadd.s32 %v89, 24
    %v93 = vadd.s32 %v89, 32
    %v94 = vadd.s32 %v89, 40
    %v95 = vadd.s32 %v89, 48
    %vm96 = vcmp.ge.s32.totalorder %v89, 7
    %vm97 = vcmp.ge.s32.totalorder %v90, 7
    %vm98 = vcmp.ge.s32.totalorder %v91, 7
    %vm99 = vcmp.ge.s32.totalorder %v92, 7
    %vm100 = vcmp.ge.s32.totalorder %v93, 7
    %vm101 = vcmp.ge.s32.totalorder %v94, 7
    %vm102 = vcmp.ge.s32.totalorder %v95, 7
    %v103 = vsub.s32 %v89, 7
    %v104 = vsub.s32 %v90, 7
    %v105 = vsub.s32 %v91, 7
    %v106 = vsub.s32 %v92, 7
    %v107 = vsub.s32 %v93, 7
    %v108 = vsub.s32 %v94, 7
    %v109 = vsub.s32 %v95, 7
    %vm110 = vcmp.lt.s32.totalorder %v103, 0
    %v111 = vsub.s32 0, %v103
    %v112 = vsel %vm110, %v111, %v103
    %v113 = vmul.u32.u64.compose %v112, 2863311531
    %v114 = vextract.low.u32 %v113
    %v115 = vextract.high.u32 %v113
    %v116 = vshrl.u32 %v115, 4
    %v117 = vmul.u32 %v116, 24
    %v118 = vsub.s32 %v112, %v117
    %v119 = vsub.s32 0, %v118
    %v120 = vsel %vm110, %v119, %v118
    %vm121 = vcmp.lt.s32.totalorder %v104, 0
    %v122 = vsub.s32 0, %v104
    %v123 = vsel %vm121, %v122, %v104
    %v124 = vmul.u32.u64.compose %v123, 2863311531
    %v125 = vextract.low.u32 %v124
    %v126 = vextract.high.u32 %v124
    %v127 = vshrl.u32 %v126, 4
    %v128 = vmul.u32 %v127, 24
    %v129 = vsub.s32 %v123, %v128
    %v130 = vsub.s32 0, %v129
    %v131 = vsel %vm121, %v130, %v129
    %vm132 = vcmp.lt.s32.totalorder %v105, 0
    %v133 = vsub.s32 0, %v105
    %v134 = vsel %vm132, %v133, %v105
    %v135 = vmul.u32.u64.compose %v134, 2863311531
    %v136 = vextract.low.u32 %v135
    %v137 = vextract.high.u32 %v135
    %v138 = vshrl.u32 %v137, 4
    %v139 = vmul.u32 %v138, 24
    %v140 = vsub.s32 %v134, %v139
    %v141 = vsub.s32 0, %v140
    %v142 = vsel %vm132, %v141, %v140
    %vm143 = vcmp.lt.s32.totalorder %v106, 0
    %v144 = vsub.s32 0, %v106
    %v145 = vsel %vm143, %v144, %v106
    %v146 = vmul.u32.u64.compose %v145, 2863311531
    %v147 = vextract.low.u32 %v146
    %v148 = vextract.high.u32 %v146
    %v149 = vshrl.u32 %v148, 4
    %v150 = vmul.u32 %v149, 24
    %v151 = vsub.s32 %v145, %v150
    %v152 = vsub.s32 0, %v151
    %v153 = vsel %vm143, %v152, %v151
    %vm154 = vcmp.lt.s32.totalorder %v107, 0
    %v155 = vsub.s32 0, %v107
    %v156 = vsel %vm154, %v155, %v107
    %v157 = vmul.u32.u64.compose %v156, 2863311531
    %v158 = vextract.low.u32 %v157
    %v159 = vextract.high.u32 %v157
    %v160 = vshrl.u32 %v159, 4
    %v161 = vmul.u32 %v160, 24
    %v162 = vsub.s32 %v156, %v161
    %v163 = vsub.s32 0, %v162
    %v164 = vsel %vm154, %v163, %v162
    %vm165 = vcmp.lt.s32.totalorder %v108, 0
    %v166 = vsub.s32 0, %v108
    %v167 = vsel %vm165, %v166, %v108
    %v168 = vmul.u32.u64.compose %v167, 2863311531
    %v169 = vextract.low.u32 %v168
    %v170 = vextract.high.u32 %v168
    %v171 = vshrl.u32 %v170, 4
    %v172 = vmul.u32 %v171, 24
    %v173 = vsub.s32 %v167, %v172
    %v174 = vsub.s32 0, %v173
    %v175 = vsel %vm165, %v174, %v173
    %vm176 = vcmp.lt.s32.totalorder %v109, 0
    %v177 = vsub.s32 0, %v109
    %v178 = vsel %vm176, %v177, %v109
    %v179 = vmul.u32.u64.compose %v178, 2863311531
    %v180 = vextract.low.u32 %v179
    %v181 = vextract.high.u32 %v179
    %v182 = vshrl.u32 %v181, 4
    %v183 = vmul.u32 %v182, 24
    %v184 = vsub.s32 %v178, %v183
    %v185 = vsub.s32 0, %v184
    %v186 = vsel %vm176, %v185, %v184
    %vm187 = vcmp.lt.s32.totalorder %v120, 16
    %vm188 = vcmp.lt.s32.totalorder %v131, 16
    %vm189 = vcmp.lt.s32.totalorder %v142, 16
    %vm190 = vcmp.lt.s32.totalorder %v153, 16
    %vm191 = vcmp.lt.s32.totalorder %v164, 16
    %vm192 = vcmp.lt.s32.totalorder %v175, 16
    %vm193 = vcmp.lt.s32.totalorder %v186, 16
    %vm194 = vmand %vm96, %vm187
    %vm195 = vmand %vm97, %vm188
    %vm196 = vmand %vm98, %vm189
    %vm197 = vmand %vm99, %vm190
    %vm198 = vmand %vm100, %vm191
    %vm199 = vmand %vm101, %vm192
    %vm200 = vmand %vm102, %vm193
    %v201 = vsel %vm194, 1.0, 0.0
    %v202 = vsel %vm195, 1.0, 0.0
    %v203 = vsel %vm196, 1.0, 0.0
    %v204 = vsel %vm197, 1.0, 0.0
    %v205 = vsel %vm198, 1.0, 0.0
    %v206 = vsel %vm199, 1.0, 0.0
    %v207 = vsel %vm200, 1.0, 0.0
    %vm208 = vcmask 523264
    %209 = vst.msk [vmem:[#allocation2] sm:$0xff] %vm208, 0.0
    %210 = vst.msk [vmem:[#allocation2 + $0x18] sm:$0xff] %vm208, 0.0
    %211 = vst.msk [vmem:[#allocation2 + $0x30] sm:$0xff] %vm208, 0.0
    %v212 = vld [vmem:[#allocation4] sm:$0xff]
    %v213 = vld [vmem:[#allocation4 + $0x8] sm:$0xff]
    %214 = vst.msk [vmem:[#allocation2 + $0x8] sm:$0xff] %vm208, %v212
    %215 = vst.msk [vmem:[#allocation2 + $0x10] sm:$0xff] %vm208, %v213
    %v216 = vld [vmem:[#allocation4 + $0x10] sm:$0xff]
    %v217 = vld [vmem:[#allocation4 + $0x18] sm:$0xff]
    %218 = vst.msk [vmem:[#allocation2 + $0x20] sm:$0xff] %vm208, %v216
    %219 = vst.msk [vmem:[#allocation2 + $0x28] sm:$0xff] %vm208, %v217
    %v220 = vld [vmem:[#allocation2] sm:$0xff]
    %v221 = vld [vmem:[#allocation2 + $0x8] sm:$0xff]
    %v222 = vld [vmem:[#allocation2 + $0x10] sm:$0xff]
    %v223 = vld [vmem:[#allocation2 + $0x18] sm:$0xff]
    %v224 = vld [vmem:[#allocation2 + $0x20] sm:$0xff]
    %v225 = vld [vmem:[#allocation2 + $0x28] sm:$0xff]
    %v226 = vld [vmem:[#allocation2 + $0x30] sm:$0x3f]
    %v227 = vld [vmem:[#allocation7] sm:$0xff]
    %v228 = vld [vmem:[#allocation7 + $0x8] sm:$0xff]
    %v229 = vld [vmem:[#allocation7 + $0x10] sm:$0xff]
    %v230 = vld [vmem:[#allocation7 + $0x18] sm:$0xff]
    %v231 = vld [vmem:[#allocation7 + $0x20] sm:$0xff]
    %v232 = vld [vmem:[#allocation7 + $0x28] sm:$0xff]
    %v233 = vld [vmem:[#allocation7 + $0x30] sm:$0xff]
    %v234 = vld [vmem:[#allocation7 + $0x38] sm:$0xff]
    %v235 = vld [vmem:[#allocation2 + $0x1] sm:$0xff]
    %v236 = vld [vmem:[#allocation2 + $0x9] sm:$0xff]
    %v237 = vld [vmem:[#allocation2 + $0x11] sm:$0xff]
    %v238 = vld [vmem:[#allocation2 + $0x19] sm:$0xff]
    %v239 = vld [vmem:[#allocation2 + $0x21] sm:$0xff]
    %v240 = vld [vmem:[#allocation2 + $0x29] sm:$0xff]
    %v241 = vld [vmem:[#allocation2 + $0x31] sm:$0x3f]
    %s242 = scalar_lea.vmem [#allocation7], 64
    %v243 = vld [vmem:[%s242] sm:$0xff]
    %v244 = vld [vmem:[%s242 + $0x8] sm:$0xff]
    %v245 = vld [vmem:[%s242 + $0x10] sm:$0xff]
    %v246 = vld [vmem:[%s242 + $0x18] sm:$0xff]
    %v247 = vld [vmem:[%s242 + $0x20] sm:$0xff]
    %v248 = vld [vmem:[%s242 + $0x28] sm:$0xff]
    %v249 = vld [vmem:[%s242 + $0x30] sm:$0xff]
    %v250 = vld [vmem:[%s242 + $0x38] sm:$0xff]
    %v252 = vsel %vm208, %v235, 0
    %v255 = vsel %vm208, %v236, 0
    %v258 = vsel %vm208, %v237, 0
    %v261 = vsel %vm208, %v238, 0
    %v264 = vsel %vm208, %v239, 0
    %v267 = vsel %vm208, %v240, 0
    %v270 = vsel %vm208, %v241, 0
    %272 = vmatprep.subr.mxu0 0.0
    %273 = vmatpush1.msra.mxu0 0.0
    %274 = vmatprep.subr.mxu0 0.0
    %275 = vmatpush1.msra.mxu0 0.0
    %276 = vmatprep.subr.mxu0 0.0
    %277 = vmatpush1.msra.mxu0 0.0
    %278 = vmatprep.subr.mxu0 0.0
    %279 = vmatpush1.msra.mxu0 0.0
    %280 = vmatprep.subr.mxu0 0.0
    %281 = vmatpush1.msra.mxu0 0.0
    %282 = vmatprep.subr.mxu0 0.0
    %283 = vmatpush1.msra.mxu0 0.0
    %284 = vmatprep.subr.mxu0 0.0
    %285 = vmatpush1.msra.mxu0 0.0
    %286 = vmatprep.subr.mxu0 0.0
    %287 = vmatpush1.msra.mxu0 0.0
    %288 = vmatprep.subr.mxu0 0.0
    %289 = vmatpush1.msra.mxu0 %v250
    %290 = vmatprep.subr.mxu0 0.0
    %291 = vmatpush1.msra.mxu0 %v249
    %292 = vmatprep.subr.mxu0 0.0
    %293 = vmatpush1.msra.mxu0 %v248
    %294 = vmatprep.subr.mxu0 0.0
    %295 = vmatpush1.msra.mxu0 %v247
    %296 = vmatprep.subr.mxu0 0.0
    %297 = vmatpush1.msra.mxu0 %v246
    %298 = vmatprep.subr.mxu0 0.0
    %299 = vmatpush1.msra.mxu0 %v245
    %300 = vmatprep.subr.mxu0 0.0
    %301 = vmatpush1.msra.mxu0 %v244
    %302 = vmatprep.subr.mxu0 0.0
    %303 = vmatpush1.msra.mxu0 %v243
    %304 = vmatprep.subr.mxu0 0.0
    %305 = vmatpush2.msra.mxu0 0.0
    %306 = vmatprep.subr.mxu0 0.0
    %307 = vmatpush2.msra.mxu0 0.0
    %308 = vmatprep.subr.mxu0 0.0
    %309 = vmatpush2.msra.mxu0 0.0
    %310 = vmatprep.subr.mxu0 0.0
    %311 = vmatpush2.msra.mxu0 0.0
    %312 = vmatprep.subr.mxu0 0.0
    %313 = vmatpush2.msra.mxu0 0.0
    %314 = vmatprep.subr.mxu0 0.0
    %315 = vmatpush2.msra.mxu0 0.0
    %316 = vmatprep.subr.mxu0 0.0
    %317 = vmatpush2.msra.mxu0 0.0
    %318 = vmatprep.subr.mxu0 0.0
    %319 = vmatpush2.msra.mxu0 0.0
    %320 = vmatprep.subr.mxu0 0.0
    %321 = vmatpush2.msra.mxu0 0.0
    %322 = vmatprep.subr.mxu0 0.0
    %323 = vmatpush2.msra.mxu0 0.0
    %324 = vmatprep.subr.mxu0 0.0
    %325 = vmatpush2.msra.mxu0 0.0
    %326 = vmatprep.subr.mxu0 0.0
    %327 = vmatpush2.msra.mxu0 0.0
    %328 = vmatprep.subr.mxu0 0.0
    %329 = vmatpush2.msra.mxu0 0.0
    %330 = vmatprep.subr.mxu0 0.0
    %331 = vmatpush2.msra.mxu0 0.0
    %332 = vmatprep.subr.mxu0 0.0
    %333 = vmatpush2.msra.mxu0 0.0
    %334 = vmatprep.subr.mxu0 0.0
    %335 = vmatpush2.msra.mxu0 0.0
    %336 = vmatprep.mubr.f32.mxu0 0.0
    %337 = vmatmul.mubr.f32.gmra.mxu0 %v252
    %v338 = vpop.f32.mrf.mxu0
    %v339 = vadd.f32 0.0, %v338
    %v340 = vpop.f32.mrf.mxu0
    %341 = vmatprep.mubr.f32.mxu0 0.0
    %342 = vmatmul.mubr.f32.gmra.mxu0 %v255
    %v343 = vpop.f32.mrf.mxu0
    %v344 = vadd.f32 0.0, %v343
    %v345 = vpop.f32.mrf.mxu0
    %346 = vmatprep.mubr.f32.mxu0 0.0
    %347 = vmatmul.mubr.f32.gmra.mxu0 %v258
    %v348 = vpop.f32.mrf.mxu0
    %v349 = vadd.f32 0.0, %v348
    %v350 = vpop.f32.mrf.mxu0
    %351 = vmatprep.mubr.f32.mxu0 0.0
    %352 = vmatmul.mubr.f32.gmra.mxu0 %v261
    %v353 = vpop.f32.mrf.mxu0
    %v354 = vadd.f32 0.0, %v353
    %v355 = vpop.f32.mrf.mxu0
    %356 = vmatprep.mubr.f32.mxu0 0.0
    %357 = vmatmul.mubr.f32.gmra.mxu0 %v264
    %v358 = vpop.f32.mrf.mxu0
    %v359 = vadd.f32 0.0, %v358
    %v360 = vpop.f32.mrf.mxu0
    %361 = vmatprep.mubr.f32.mxu0 0.0
    %362 = vmatmul.mubr.f32.gmra.mxu0 %v267
    %v363 = vpop.f32.mrf.mxu0
    %v364 = vadd.f32 0.0, %v363
    %v365 = vpop.f32.mrf.mxu0
    %366 = vmatprep.mubr.f32.mxu0 0.0
    %367 = vmatmul.mubr.f32.gmra.mxu0 %v270
    %v368 = vpop.f32.mrf.mxu0
    %v369 = vadd.f32 0.0, %v368
    %v370 = vpop.f32.mrf.mxu0
    %371 = vdwg.mxu0
    %v373 = vsel %vm208, %v220, 0
    %v376 = vsel %vm208, %v221, 0
    %v379 = vsel %vm208, %v222, 0
    %v382 = vsel %vm208, %v223, 0
    %v385 = vsel %vm208, %v224, 0
    %v388 = vsel %vm208, %v225, 0
    %v391 = vsel %vm208, %v226, 0
    %393 = vmatprep.subr.mxu0 0.0
    %394 = vmatpush1.msra.mxu0 0.0
    %395 = vmatprep.subr.mxu0 0.0
    %396 = vmatpush1.msra.mxu0 0.0
    %397 = vmatprep.subr.mxu0 0.0
    %398 = vmatpush1.msra.mxu0 0.0
    %399 = vmatprep.subr.mxu0 0.0
    %400 = vmatpush1.msra.mxu0 0.0
    %401 = vmatprep.subr.mxu0 0.0
    %402 = vmatpush1.msra.mxu0 0.0
    %403 = vmatprep.subr.mxu0 0.0
    %404 = vmatpush1.msra.mxu0 0.0
    %405 = vmatprep.subr.mxu0 0.0
    %406 = vmatpush1.msra.mxu0 0.0
    %407 = vmatprep.subr.mxu0 0.0
    %408 = vmatpush1.msra.mxu0 0.0
    %409 = vmatprep.subr.mxu0 0.0
    %410 = vmatpush1.msra.mxu0 %v234
    %411 = vmatprep.subr.mxu0 0.0
    %412 = vmatpush1.msra.mxu0 %v233
    %413 = vmatprep.subr.mxu0 0.0
    %414 = vmatpush1.msra.mxu0 %v232
    %415 = vmatprep.subr.mxu0 0.0
    %416 = vmatpush1.msra.mxu0 %v231
    %417 = vmatprep.subr.mxu0 0.0
    %418 = vmatpush1.msra.mxu0 %v230
    %419 = vmatprep.subr.mxu0 0.0
    %420 = vmatpush1.msra.mxu0 %v229
    %421 = vmatprep.subr.mxu0 0.0
    %422 = vmatpush1.msra.mxu0 %v228
    %423 = vmatprep.subr.mxu0 0.0
    %424 = vmatpush1.msra.mxu0 %v227
    %425 = vmatprep.subr.mxu0 0.0
    %426 = vmatpush2.msra.mxu0 0.0
    %427 = vmatprep.subr.mxu0 0.0
    %428 = vmatpush2.msra.mxu0 0.0
    %429 = vmatprep.subr.mxu0 0.0
    %430 = vmatpush2.msra.mxu0 0.0
    %431 = vmatprep.subr.mxu0 0.0
    %432 = vmatpush2.msra.mxu0 0.0
    %433 = vmatprep.subr.mxu0 0.0
    %434 = vmatpush2.msra.mxu0 0.0
    %435 = vmatprep.subr.mxu0 0.0
    %436 = vmatpush2.msra.mxu0 0.0
    %437 = vmatprep.subr.mxu0 0.0
    %438 = vmatpush2.msra.mxu0 0.0
    %439 = vmatprep.subr.mxu0 0.0
    %440 = vmatpush2.msra.mxu0 0.0
    %441 = vmatprep.subr.mxu0 0.0
    %442 = vmatpush2.msra.mxu0 0.0
    %443 = vmatprep.subr.mxu0 0.0
    %444 = vmatpush2.msra.mxu0 0.0
    %445 = vmatprep.subr.mxu0 0.0
    %446 = vmatpush2.msra.mxu0 0.0
    %447 = vmatprep.subr.mxu0 0.0
    %448 = vmatpush2.msra.mxu0 0.0
    %449 = vmatprep.subr.mxu0 0.0
    %450 = vmatpush2.msra.mxu0 0.0
    %451 = vmatprep.subr.mxu0 0.0
    %452 = vmatpush2.msra.mxu0 0.0
    %453 = vmatprep.subr.mxu0 0.0
    %454 = vmatpush2.msra.mxu0 0.0
    %455 = vmatprep.subr.mxu0 0.0
    %456 = vmatpush2.msra.mxu0 0.0
    %457 = vmatprep.mubr.f32.mxu0 0.0
    %458 = vmatmul.mubr.f32.gmra.mxu0 %v373
    %v459 = vpop.f32.mrf.mxu0
    %v460 = vadd.f32 %v339, %v459
    %v461 = vpop.f32.mrf.mxu0
    %462 = vmatprep.mubr.f32.mxu0 0.0
    %463 = vmatmul.mubr.f32.gmra.mxu0 %v376
    %v464 = vpop.f32.mrf.mxu0
    %v465 = vadd.f32 %v344, %v464
    %v466 = vpop.f32.mrf.mxu0
    %467 = vmatprep.mubr.f32.mxu0 0.0
    %468 = vmatmul.mubr.f32.gmra.mxu0 %v379
    %v469 = vpop.f32.mrf.mxu0
    %v470 = vadd.f32 %v349, %v469
    %v471 = vpop.f32.mrf.mxu0
    %472 = vmatprep.mubr.f32.mxu0 0.0
    %473 = vmatmul.mubr.f32.gmra.mxu0 %v382
    %v474 = vpop.f32.mrf.mxu0
    %v475 = vadd.f32 %v354, %v474
    %v476 = vpop.f32.mrf.mxu0
    %477 = vmatprep.mubr.f32.mxu0 0.0
    %478 = vmatmul.mubr.f32.gmra.mxu0 %v385
    %v479 = vpop.f32.mrf.mxu0
    %v480 = vadd.f32 %v359, %v479
    %v481 = vpop.f32.mrf.mxu0
    %482 = vmatprep.mubr.f32.mxu0 0.0
    %483 = vmatmul.mubr.f32.gmra.mxu0 %v388
    %v484 = vpop.f32.mrf.mxu0
    %v485 = vadd.f32 %v364, %v484
    %v486 = vpop.f32.mrf.mxu0
    %487 = vmatprep.mubr.f32.mxu0 0.0
    %488 = vmatmul.mubr.f32.gmra.mxu0 %v391
    %v489 = vpop.f32.mrf.mxu0
    %v490 = vadd.f32 %v369, %v489
    %v491 = vpop.f32.mrf.mxu0
    %492 = vdwg.mxu0
    %v493 = vld [vmem:[#allocation2 + $0x2] sm:$0xff]
    %v494 = vld [vmem:[#allocation2 + $0xa] sm:$0xff]
    %v495 = vld [vmem:[#allocation2 + $0x12] sm:$0xff]
    %v496 = vld [vmem:[#allocation2 + $0x1a] sm:$0xff]
    %v497 = vld [vmem:[#allocation2 + $0x22] sm:$0xff]
    %v498 = vld [vmem:[#allocation2 + $0x2a] sm:$0xff]
    %v499 = vld [vmem:[#allocation2 + $0x32] sm:$0x3f]
    %s500 = scalar_lea.vmem [#allocation7], 128
    %v501 = vld [vmem:[%s500] sm:$0xff]
    %v502 = vld [vmem:[%s500 + $0x8] sm:$0xff]
    %v503 = vld [vmem:[%s500 + $0x10] sm:$0xff]
    %v504 = vld [vmem:[%s500 + $0x18] sm:$0xff]
    %v505 = vld [vmem:[%s500 + $0x20] sm:$0xff]
    %v506 = vld [vmem:[%s500 + $0x28] sm:$0xff]
    %v507 = vld [vmem:[%s500 + $0x30] sm:$0xff]
    %v508 = vld [vmem:[%s500 + $0x38] sm:$0xff]
    %v510 = vsel %vm208, %v493, 0
    %v513 = vsel %vm208, %v494, 0
    %v516 = vsel %vm208, %v495, 0
    %v519 = vsel %vm208, %v496, 0
    %v522 = vsel %vm208, %v497, 0
    %v525 = vsel %vm208, %v498, 0
    %v528 = vsel %vm208, %v499, 0
    %530 = vmatprep.subr.mxu0 0.0
    %531 = vmatpush1.msra.mxu0 0.0
    %532 = vmatprep.subr.mxu0 0.0
    %533 = vmatpush1.msra.mxu0 0.0
    %534 = vmatprep.subr.mxu0 0.0
    %535 = vmatpush1.msra.mxu0 0.0
    %536 = vmatprep.subr.mxu0 0.0
    %537 = vmatpush1.msra.mxu0 0.0
    %538 = vmatprep.subr.mxu0 0.0
    %539 = vmatpush1.msra.mxu0 0.0
    %540 = vmatprep.subr.mxu0 0.0
    %541 = vmatpush1.msra.mxu0 0.0
    %542 = vmatprep.subr.mxu0 0.0
    %543 = vmatpush1.msra.mxu0 0.0
    %544 = vmatprep.subr.mxu0 0.0
    %545 = vmatpush1.msra.mxu0 0.0
    %546 = vmatprep.subr.mxu0 0.0
    %547 = vmatpush1.msra.mxu0 %v508
    %548 = vmatprep.subr.mxu0 0.0
    %549 = vmatpush1.msra.mxu0 %v507
    %550 = vmatprep.subr.mxu0 0.0
    %551 = vmatpush1.msra.mxu0 %v506
    %552 = vmatprep.subr.mxu0 0.0
    %553 = vmatpush1.msra.mxu0 %v505
    %554 = vmatprep.subr.mxu0 0.0
    %555 = vmatpush1.msra.mxu0 %v504
    %556 = vmatprep.subr.mxu0 0.0
    %557 = vmatpush1.msra.mxu0 %v503
    %558 = vmatprep.subr.mxu0 0.0
    %559 = vmatpush1.msra.mxu0 %v502
    %560 = vmatprep.subr.mxu0 0.0
    %561 = vmatpush1.msra.mxu0 %v501
    %562 = vmatprep.subr.mxu0 0.0
    %563 = vmatpush2.msra.mxu0 0.0
    %564 = vmatprep.subr.mxu0 0.0
    %565 = vmatpush2.msra.mxu0 0.0
    %566 = vmatprep.subr.mxu0 0.0
    %567 = vmatpush2.msra.mxu0 0.0
    %568 = vmatprep.subr.mxu0 0.0
    %569 = vmatpush2.msra.mxu0 0.0
    %570 = vmatprep.subr.mxu0 0.0
    %571 = vmatpush2.msra.mxu0 0.0
    %572 = vmatprep.subr.mxu0 0.0
    %573 = vmatpush2.msra.mxu0 0.0
    %574 = vmatprep.subr.mxu0 0.0
    %575 = vmatpush2.msra.mxu0 0.0
    %576 = vmatprep.subr.mxu0 0.0
    %577 = vmatpush2.msra.mxu0 0.0
    %578 = vmatprep.subr.mxu0 0.0
    %579 = vmatpush2.msra.mxu0 0.0
    %580 = vmatprep.subr.mxu0 0.0
    %581 = vmatpush2.msra.mxu0 0.0
    %582 = vmatprep.subr.mxu0 0.0
    %583 = vmatpush2.msra.mxu0 0.0
    %584 = vmatprep.subr.mxu0 0.0
    %585 = vmatpush2.msra.mxu0 0.0
    %586 = vmatprep.subr.mxu0 0.0
    %587 = vmatpush2.msra.mxu0 0.0
    %588 = vmatprep.subr.mxu0 0.0
    %589 = vmatpush2.msra.mxu0 0.0
    %590 = vmatprep.subr.mxu0 0.0
    %591 = vmatpush2.msra.mxu0 0.0
    %592 = vmatprep.subr.mxu0 0.0
    %593 = vmatpush2.msra.mxu0 0.0
    %594 = vmatprep.mubr.f32.mxu0 0.0
    %595 = vmatmul.mubr.f32.gmra.mxu0 %v510
    %v596 = vpop.f32.mrf.mxu0
    %v597 = vadd.f32 0.0, %v596
    %v598 = vpop.f32.mrf.mxu0
    %599 = vmatprep.mubr.f32.mxu0 0.0
    %600 = vmatmul.mubr.f32.gmra.mxu0 %v513
    %v601 = vpop.f32.mrf.mxu0
    %v602 = vadd.f32 0.0, %v601
    %v603 = vpop.f32.mrf.mxu0
    %604 = vmatprep.mubr.f32.mxu0 0.0
    %605 = vmatmul.mubr.f32.gmra.mxu0 %v516
    %v606 = vpop.f32.mrf.mxu0
    %v607 = vadd.f32 0.0, %v606
    %v608 = vpop.f32.mrf.mxu0
    %609 = vmatprep.mubr.f32.mxu0 0.0
    %610 = vmatmul.mubr.f32.gmra.mxu0 %v519
    %v611 = vpop.f32.mrf.mxu0
    %v612 = vadd.f32 0.0, %v611
    %v613 = vpop.f32.mrf.mxu0
    %614 = vmatprep.mubr.f32.mxu0 0.0
    %615 = vmatmul.mubr.f32.gmra.mxu0 %v522
    %v616 = vpop.f32.mrf.mxu0
    %v617 = vadd.f32 0.0, %v616
    %v618 = vpop.f32.mrf.mxu0
    %619 = vmatprep.mubr.f32.mxu0 0.0
    %620 = vmatmul.mubr.f32.gmra.mxu0 %v525
    %v621 = vpop.f32.mrf.mxu0
    %v622 = vadd.f32 0.0, %v621
    %v623 = vpop.f32.mrf.mxu0
    %624 = vmatprep.mubr.f32.mxu0 0.0
    %625 = vmatmul.mubr.f32.gmra.mxu0 %v528
    %v626 = vpop.f32.mrf.mxu0
    %v627 = vadd.f32 0.0, %v626
    %v628 = vpop.f32.mrf.mxu0
    %629 = vdwg.mxu0
    %v630 = vadd.f32 %v460, %v597
    %v631 = vadd.f32 %v465, %v602
    %v632 = vadd.f32 %v470, %v607
    %v633 = vadd.f32 %v475, %v612
    %v634 = vadd.f32 %v480, %v617
    %v635 = vadd.f32 %v485, %v622
    %v636 = vadd.f32 %v490, %v627
    %v637 = vld [vmem:[%s3] sm:$0x1]
    %v638 = vld [vmem:[%s4] sm:$0x1]
    %v639 = vmul.f32 %v630, %v201
    %v640 = vmul.f32 %v631, %v202
    %v641 = vmul.f32 %v632, %v203
    %v642 = vmul.f32 %v633, %v204
    %v643 = vmul.f32 %v634, %v205
    %v644 = vmul.f32 %v635, %v206
    %v645 = vmul.f32 %v636, %v207
    %v646 = vadd.f32 %v639, %v640
    %v647 = vadd.f32 %v646, %v641
    %v648 = vadd.f32 %v647, %v642
    %v649 = vadd.f32 %v648, %v643
    %v650 = vadd.f32 %v649, %v644
    %vm651 = vcmask 1045504
    %v652 = vsel %vm651, %v645, 0.0
    %v653 = vadd.f32 %v650, %v652
    %v654 = vrot.slane %v653, 4
    %v655 = vadd.f32 %v653, %v654
    %v656 = vrot.slane %v655, 2
    %v657 = vadd.f32 %v655, %v656
    %v658 = vrot.slane %v657, 1
    %v659 = vadd.f32 %v657, %v658
    %v660 = vmul.f32 %v639, %v630
    %v661 = vmul.f32 %v640, %v631
    %v662 = vmul.f32 %v641, %v632
    %v663 = vmul.f32 %v642, %v633
    %v664 = vmul.f32 %v643, %v634
    %v665 = vmul.f32 %v644, %v635
    %v666 = vmul.f32 %v645, %v636
    %v667 = vadd.f32 %v660, %v661
    %v668 = vadd.f32 %v667, %v662
    %v669 = vadd.f32 %v668, %v663
    %v670 = vadd.f32 %v669, %v664
    %v671 = vadd.f32 %v670, %v665
    %v672 = vsel %vm651, %v666, 0.0
    %v673 = vadd.f32 %v671, %v672
    %v674 = vrot.slane %v673, 4
    %v675 = vadd.f32 %v673, %v674
    %v676 = vrot.slane %v675, 2
    %v677 = vadd.f32 %v675, %v676
    %v678 = vrot.slane %v677, 1
    %v679 = vadd.f32 %v677, %v678
    %vm680 = vcmask 1040384
    %v681 = vsel %vm680, %v659, %v679
    %682 = vrot.lane.b32.xlu0 %v681, 8
    %v683 = vpop.permute.xlu0 %682
    %v684 = vadd.f32 %v681, %v683
    %685 = vrot.lane.b32.xlu0 %v684, 16
    %v686 = vpop.permute.xlu0 %685
    %v687 = vadd.f32 %v684, %v686
    %688 = vrot.lane.b32.xlu0 %v687, 32
    %v689 = vpop.permute.xlu0 %688
    %v690 = vadd.f32 %v687, %v689
    %691 = vrot.lane.b32.xlu0 %v690, 64
    %v692 = vpop.permute.xlu0 %691
    %v693 = vadd.f32 %v690, %v692
    %v694 = vmul.f32 %v693, 0.001953125
    %v695 = vmul.f32 %v694, %v694
    %v697 = vrot.slane %v695, 7
    %v699 = vsub.f32 %v694, %v697
    %v700 = vadd.f32 %v699, 1e-05
    %v701 = vrsqrt.pop %v700
    %v704 = vunpack.c.l.s4 1966171168
    %v705 = vunpack.c.0.s8 %v704
    %v706 = vlaneseq
    %v707 = vshrl.u32 %v706, 7
    %v708 = vsub.s32 %v705, %v707
    %v709 = vrot.slane %v701, %v708
    %v710 = vcombine.high %v709, %v709
    %v712 = vunpack.c.l.s4 1966171168
    %v713 = vunpack.c.0.s8 %v712
    %v714 = vlaneseq
    %v715 = vshrl.u32 %v714, 7
    %v716 = vsub.s32 %v713, %v715
    %v717 = vrot.slane %v710, %v716
    %v719 = vmul.f32 %v637, %v717
    %v720 = vmul.f32 %v694, %v719
    %v721 = vsub.f32 %v638, %v720
    %722 = vst [vmem:[#allocation3] sm:$0xff] 0.0
    %723 = vst [vmem:[#allocation3 + $0x18] sm:$0xff] 0.0
    %724 = vst [vmem:[#allocation3 + $0x30] sm:$0xff] 0.0
    %v726 = vlaneseq
    %v727 = vshrl.u32 %v726, 7
    %v728 = vsub.s32 0, %v727
    %v729 = vrot.slane %v719, %v728
    %v731 = vmul.f32 %v630, %v729
    %v732 = vmul.f32 %v631, %v729
    %v733 = vmul.f32 %v632, %v729
    %v734 = vmul.f32 %v633, %v729
    %v735 = vmul.f32 %v634, %v729
    %v736 = vmul.f32 %v635, %v729
    %v738 = vlaneseq
    %v739 = vshrl.u32 %v738, 7
    %v740 = vsub.s32 0, %v739
    %v741 = vrot.slane %v721, %v740
    %v743 = vadd.f32 %v731, %v741
    %v744 = vadd.f32 %v732, %v741
    %v745 = vadd.f32 %v733, %v741
    %v746 = vadd.f32 %v734, %v741
    %v747 = vadd.f32 %v735, %v741
    %v748 = vadd.f32 %v736, %v741
    %v749 = vmax.f32 %v743, 0.0
    %v750 = vmax.f32 %v744, 0.0
    %v751 = vmax.f32 %v745, 0.0
    %v752 = vmax.f32 %v746, 0.0
    %v753 = vmax.f32 %v747, 0.0
    %v754 = vmax.f32 %v748, 0.0
    %755 = vst [vmem:[#allocation3 + $0x1] sm:$0x80] %v749
    %756 = vst [vmem:[#allocation3 + $0x9] sm:$0xff] %v750
    %757 = vst [vmem:[#allocation3 + $0x11] sm:$0x7f] %v751
    %758 = vst [vmem:[#allocation3 + $0x19] sm:$0x80] %v752
    %759 = vst [vmem:[#allocation3 + $0x21] sm:$0xff] %v753
    %760 = vst [vmem:[#allocation3 + $0x29] sm:$0x7f] %v754
    %v761 = vld [vmem:[#allocation3] sm:$0xff]
    %v762 = vld [vmem:[#allocation3 + $0x8] sm:$0xff]
    %v763 = vld [vmem:[#allocation3 + $0x10] sm:$0xff]
    %v764 = vld [vmem:[#allocation3 + $0x18] sm:$0xff]
    %v765 = vld [vmem:[#allocation3 + $0x20] sm:$0xff]
    %v766 = vld [vmem:[#allocation3 + $0x28] sm:$0xff]
    %v767 = vld [vmem:[#allocation3 + $0x30] sm:$0x3f]
    %v768 = vld [vmem:[#allocation9] sm:$0xff]
    %v769 = vld [vmem:[#allocation9 + $0x8] sm:$0xff]
    %v770 = vld [vmem:[#allocation9 + $0x10] sm:$0xff]
    %v771 = vld [vmem:[#allocation9 + $0x18] sm:$0xff]
    %v772 = vld [vmem:[#allocation9 + $0x20] sm:$0xff]
    %v773 = vld [vmem:[#allocation9 + $0x28] sm:$0xff]
    %v774 = vld [vmem:[#allocation9 + $0x30] sm:$0xff]
    %v775 = vld [vmem:[#allocation9 + $0x38] sm:$0xff]
    %v776 = vld [vmem:[#allocation9 + $0x40] sm:$0xff]
    %v777 = vld [vmem:[#allocation9 + $0x48] sm:$0xff]
    %v778 = vld [vmem:[#allocation9 + $0x50] sm:$0xff]
    %v779 = vld [vmem:[#allocation9 + $0x58] sm:$0xff]
    %v780 = vld [vmem:[#allocation9 + $0x60] sm:$0xff]
    %v781 = vld [vmem:[#allocation9 + $0x68] sm:$0xff]
    %v782 = vld [vmem:[#allocation9 + $0x70] sm:$0xff]
    %v783 = vld [vmem:[#allocation9 + $0x78] sm:$0xff]
    %v784 = vld [vmem:[#allocation3 + $0x1] sm:$0xff]
    %v785 = vld [vmem:[#allocation3 + $0x9] sm:$0xff]
    %v786 = vld [vmem:[#allocation3 + $0x11] sm:$0xff]
    %v787 = vld [vmem:[#allocation3 + $0x19] sm:$0xff]
    %v788 = vld [vmem:[#allocation3 + $0x21] sm:$0xff]
    %v789 = vld [vmem:[#allocation3 + $0x29] sm:$0xff]
    %v790 = vld [vmem:[#allocation3 + $0x31] sm:$0x3f]
    %s791 = scalar_lea.vmem [#allocation9], 128
    %v792 = vld [vmem:[%s791] sm:$0xff]
    %v793 = vld [vmem:[%s791 + $0x8] sm:$0xff]
    %v794 = vld [vmem:[%s791 + $0x10] sm:$0xff]
    %v795 = vld [vmem:[%s791 + $0x18] sm:$0xff]
    %v796 = vld [vmem:[%s791 + $0x20] sm:$0xff]
    %v797 = vld [vmem:[%s791 + $0x28] sm:$0xff]
    %v798 = vld [vmem:[%s791 + $0x30] sm:$0xff]
    %v799 = vld [vmem:[%s791 + $0x38] sm:$0xff]
    %v800 = vld [vmem:[%s791 + $0x40] sm:$0xff]
    %v801 = vld [vmem:[%s791 + $0x48] sm:$0xff]
    %v802 = vld [vmem:[%s791 + $0x50] sm:$0xff]
    %v803 = vld [vmem:[%s791 + $0x58] sm:$0xff]
    %v804 = vld [vmem:[%s791 + $0x60] sm:$0xff]
    %v805 = vld [vmem:[%s791 + $0x68] sm:$0xff]
    %v806 = vld [vmem:[%s791 + $0x70] sm:$0xff]
    %v807 = vld [vmem:[%s791 + $0x78] sm:$0xff]
    %808 = vmatprep.subr.mxu0 0.0
    %809 = vmatpush1.msra.mxu0 %v807
    %810 = vmatprep.subr.mxu0 0.0
    %811 = vmatpush1.msra.mxu0 %v806
    %812 = vmatprep.subr.mxu0 0.0
    %813 = vmatpush1.msra.mxu0 %v805
    %814 = vmatprep.subr.mxu0 0.0
    %815 = vmatpush1.msra.mxu0 %v804
    %816 = vmatprep.subr.mxu0 0.0
    %817 = vmatpush1.msra.mxu0 %v803
    %818 = vmatprep.subr.mxu0 0.0
    %819 = vmatpush1.msra.mxu0 %v802
    %820 = vmatprep.subr.mxu0 0.0
    %821 = vmatpush1.msra.mxu0 %v801
    %822 = vmatprep.subr.mxu0 0.0
    %823 = vmatpush1.msra.mxu0 %v800
    %824 = vmatprep.subr.mxu0 0.0
    %825 = vmatpush1.msra.mxu0 %v799
    %826 = vmatprep.subr.mxu0 0.0
    %827 = vmatpush1.msra.mxu0 %v798
    %828 = vmatprep.subr.mxu0 0.0
    %829 = vmatpush1.msra.mxu0 %v797
    %830 = vmatprep.subr.mxu0 0.0
    %831 = vmatpush1.msra.mxu0 %v796
    %832 = vmatprep.subr.mxu0 0.0
    %833 = vmatpush1.msra.mxu0 %v795
    %834 = vmatprep.subr.mxu0 0.0
    %835 = vmatpush1.msra.mxu0 %v794
    %836 = vmatprep.subr.mxu0 0.0
    %837 = vmatpush1.msra.mxu0 %v793
    %838 = vmatprep.subr.mxu0 0.0
    %839 = vmatpush1.msra.mxu0 %v792
    %840 = vmatprep.subr.mxu0 0.0
    %841 = vmatpush2.msra.mxu0 0.0
    %842 = vmatprep.subr.mxu0 0.0
    %843 = vmatpush2.msra.mxu0 0.0
    %844 = vmatprep.subr.mxu0 0.0
    %845 = vmatpush2.msra.mxu0 0.0
    %846 = vmatprep.subr.mxu0 0.0
    %847 = vmatpush2.msra.mxu0 0.0
    %848 = vmatprep.subr.mxu0 0.0
    %849 = vmatpush2.msra.mxu0 0.0
    %850 = vmatprep.subr.mxu0 0.0
    %851 = vmatpush2.msra.mxu0 0.0
    %852 = vmatprep.subr.mxu0 0.0
    %853 = vmatpush2.msra.mxu0 0.0
    %854 = vmatprep.subr.mxu0 0.0
    %855 = vmatpush2.msra.mxu0 0.0
    %856 = vmatprep.subr.mxu0 0.0
    %857 = vmatpush2.msra.mxu0 0.0
    %858 = vmatprep.subr.mxu0 0.0
    %859 = vmatpush2.msra.mxu0 0.0
    %860 = vmatprep.subr.mxu0 0.0
    %861 = vmatpush2.msra.mxu0 0.0
    %862 = vmatprep.subr.mxu0 0.0
    %863 = vmatpush2.msra.mxu0 0.0
    %864 = vmatprep.subr.mxu0 0.0
    %865 = vmatpush2.msra.mxu0 0.0
    %866 = vmatprep.subr.mxu0 0.0
    %867 = vmatpush2.msra.mxu0 0.0
    %868 = vmatprep.subr.mxu0 0.0
    %869 = vmatpush2.msra.mxu0 0.0
    %870 = vmatprep.subr.mxu0 0.0
    %871 = vmatpush2.msra.mxu0 0.0
    %872 = vmatprep.mubr.f32.mxu0 0.0
    %873 = vmatmul.mubr.f32.gmra.mxu0 %v784
    %v874 = vpop.f32.mrf.mxu0
    %v875 = vadd.f32 0.0, %v874
    %v876 = vpop.f32.mrf.mxu0
    %877 = vmatprep.mubr.f32.mxu0 0.0
    %878 = vmatmul.mubr.f32.gmra.mxu0 %v785
    %v879 = vpop.f32.mrf.mxu0
    %v880 = vadd.f32 0.0, %v879
    %v881 = vpop.f32.mrf.mxu0
    %882 = vmatprep.mubr.f32.mxu0 0.0
    %883 = vmatmul.mubr.f32.gmra.mxu0 %v786
    %v884 = vpop.f32.mrf.mxu0
    %v885 = vadd.f32 0.0, %v884
    %v886 = vpop.f32.mrf.mxu0
    %887 = vmatprep.mubr.f32.mxu0 0.0
    %888 = vmatmul.mubr.f32.gmra.mxu0 %v787
    %v889 = vpop.f32.mrf.mxu0
    %v890 = vadd.f32 0.0, %v889
    %v891 = vpop.f32.mrf.mxu0
    %892 = vmatprep.mubr.f32.mxu0 0.0
    %893 = vmatmul.mubr.f32.gmra.mxu0 %v788
    %v894 = vpop.f32.mrf.mxu0
    %v895 = vadd.f32 0.0, %v894
    %v896 = vpop.f32.mrf.mxu0
    %897 = vmatprep.mubr.f32.mxu0 0.0
    %898 = vmatmul.mubr.f32.gmra.mxu0 %v789
    %v899 = vpop.f32.mrf.mxu0
    %v900 = vadd.f32 0.0, %v899
    %v901 = vpop.f32.mrf.mxu0
    %902 = vmatprep.mubr.f32.mxu0 0.0
    %903 = vmatmul.mubr.f32.gmra.mxu0 %v790
    %v904 = vpop.f32.mrf.mxu0
    %v905 = vadd.f32 0.0, %v904
    %v906 = vpop.f32.mrf.mxu0
    %907 = vdwg.mxu0
    %908 = vmatprep.subr.mxu0 0.0
    %909 = vmatpush1.msra.mxu0 %v783
    %910 = vmatprep.subr.mxu0 0.0
    %911 = vmatpush1.msra.mxu0 %v782
    %912 = vmatprep.subr.mxu0 0.0
    %913 = vmatpush1.msra.mxu0 %v781
    %914 = vmatprep.subr.mxu0 0.0
    %915 = vmatpush1.msra.mxu0 %v780
    %916 = vmatprep.subr.mxu0 0.0
    %917 = vmatpush1.msra.mxu0 %v779
    %918 = vmatprep.subr.mxu0 0.0
    %919 = vmatpush1.msra.mxu0 %v778
    %920 = vmatprep.subr.mxu0 0.0
    %921 = vmatpush1.msra.mxu0 %v777
    %922 = vmatprep.subr.mxu0 0.0
    %923 = vmatpush1.msra.mxu0 %v776
    %924 = vmatprep.subr.mxu0 0.0
    %925 = vmatpush1.msra.mxu0 %v775
    %926 = vmatprep.subr.mxu0 0.0
    %927 = vmatpush1.msra.mxu0 %v774
    %928 = vmatprep.subr.mxu0 0.0
    %929 = vmatpush1.msra.mxu0 %v773
    %930 = vmatprep.subr.mxu0 0.0
    %931 = vmatpush1.msra.mxu0 %v772
    %932 = vmatprep.subr.mxu0 0.0
    %933 = vmatpush1.msra.mxu0 %v771
    %934 = vmatprep.subr.mxu0 0.0
    %935 = vmatpush1.msra.mxu0 %v770
    %936 = vmatprep.subr.mxu0 0.0
    %937 = vmatpush1.msra.mxu0 %v769
    %938 = vmatprep.subr.mxu0 0.0
    %939 = vmatpush1.msra.mxu0 %v768
    %940 = vmatprep.subr.mxu0 0.0
    %941 = vmatpush2.msra.mxu0 0.0
    %942 = vmatprep.subr.mxu0 0.0
    %943 = vmatpush2.msra.mxu0 0.0
    %944 = vmatprep.subr.mxu0 0.0
    %945 = vmatpush2.msra.mxu0 0.0
    %946 = vmatprep.subr.mxu0 0.0
    %947 = vmatpush2.msra.mxu0 0.0
    %948 = vmatprep.subr.mxu0 0.0
    %949 = vmatpush2.msra.mxu0 0.0
    %950 = vmatprep.subr.mxu0 0.0
    %951 = vmatpush2.msra.mxu0 0.0
    %952 = vmatprep.subr.mxu0 0.0
    %953 = vmatpush2.msra.mxu0 0.0
    %954 = vmatprep.subr.mxu0 0.0
    %955 = vmatpush2.msra.mxu0 0.0
    %956 = vmatprep.subr.mxu0 0.0
    %957 = vmatpush2.msra.mxu0 0.0
    %958 = vmatprep.subr.mxu0 0.0
    %959 = vmatpush2.msra.mxu0 0.0
    %960 = vmatprep.subr.mxu0 0.0
    %961 = vmatpush2.msra.mxu0 0.0
    %962 = vmatprep.subr.mxu0 0.0
    %963 = vmatpush2.msra.mxu0 0.0
    %964 = vmatprep.subr.mxu0 0.0
    %965 = vmatpush2.msra.mxu0 0.0
    %966 = vmatprep.subr.mxu0 0.0
    %967 = vmatpush2.msra.mxu0 0.0
    %968 = vmatprep.subr.mxu0 0.0
    %969 = vmatpush2.msra.mxu0 0.0
    %970 = vmatprep.subr.mxu0 0.0
    %971 = vmatpush2.msra.mxu0 0.0
    %972 = vmatprep.mubr.f32.mxu0 0.0
    %973 = vmatmul.mubr.f32.gmra.mxu0 %v761
    %v974 = vpop.f32.mrf.mxu0
    %v975 = vadd.f32 %v875, %v974
    %v976 = vpop.f32.mrf.mxu0
    %977 = vmatprep.mubr.f32.mxu0 0.0
    %978 = vmatmul.mubr.f32.gmra.mxu0 %v762
    %v979 = vpop.f32.mrf.mxu0
    %v980 = vadd.f32 %v880, %v979
    %v981 = vpop.f32.mrf.mxu0
    %982 = vmatprep.mubr.f32.mxu0 0.0
    %983 = vmatmul.mubr.f32.gmra.mxu0 %v763
    %v984 = vpop.f32.mrf.mxu0
    %v985 = vadd.f32 %v885, %v984
    %v986 = vpop.f32.mrf.mxu0
    %987 = vmatprep.mubr.f32.mxu0 0.0
    %988 = vmatmul.mubr.f32.gmra.mxu0 %v764
    %v989 = vpop.f32.mrf.mxu0
    %v990 = vadd.f32 %v890, %v989
    %v991 = vpop.f32.mrf.mxu0
    %992 = vmatprep.mubr.f32.mxu0 0.0
    %993 = vmatmul.mubr.f32.gmra.mxu0 %v765
    %v994 = vpop.f32.mrf.mxu0
    %v995 = vadd.f32 %v895, %v994
    %v996 = vpop.f32.mrf.mxu0
    %997 = vmatprep.mubr.f32.mxu0 0.0
    %998 = vmatmul.mubr.f32.gmra.mxu0 %v766
    %v999 = vpop.f32.mrf.mxu0
    %v1000 = vadd.f32 %v900, %v999
    %v1001 = vpop.f32.mrf.mxu0
    %1002 = vmatprep.mubr.f32.mxu0 0.0
    %1003 = vmatmul.mubr.f32.gmra.mxu0 %v767
    %v1004 = vpop.f32.mrf.mxu0
    %v1005 = vadd.f32 %v905, %v1004
    %v1006 = vpop.f32.mrf.mxu0
    %1007 = vdwg.mxu0
    %v1008 = vld [vmem:[#allocation3 + $0x2] sm:$0xff]
    %v1009 = vld [vmem:[#allocation3 + $0xa] sm:$0xff]
    %v1010 = vld [vmem:[#allocation3 + $0x12] sm:$0xff]
    %v1011 = vld [vmem:[#allocation3 + $0x1a] sm:$0xff]
    %v1012 = vld [vmem:[#allocation3 + $0x22] sm:$0xff]
    %v1013 = vld [vmem:[#allocation3 + $0x2a] sm:$0xff]
    %v1014 = vld [vmem:[#allocation3 + $0x32] sm:$0x3f]
    %s1015 = scalar_lea.vmem [#allocation9], 256
    %v1016 = vld [vmem:[%s1015] sm:$0xff]
    %v1017 = vld [vmem:[%s1015 + $0x8] sm:$0xff]
    %v1018 = vld [vmem:[%s1015 + $0x10] sm:$0xff]
    %v1019 = vld [vmem:[%s1015 + $0x18] sm:$0xff]
    %v1020 = vld [vmem:[%s1015 + $0x20] sm:$0xff]
    %v1021 = vld [vmem:[%s1015 + $0x28] sm:$0xff]
    %v1022 = vld [vmem:[%s1015 + $0x30] sm:$0xff]
    %v1023 = vld [vmem:[%s1015 + $0x38] sm:$0xff]
    %v1024 = vld [vmem:[%s1015 + $0x40] sm:$0xff]
    %v1025 = vld [vmem:[%s1015 + $0x48] sm:$0xff]
    %v1026 = vld [vmem:[%s1015 + $0x50] sm:$0xff]
    %v1027 = vld [vmem:[%s1015 + $0x58] sm:$0xff]
    %v1028 = vld [vmem:[%s1015 + $0x60] sm:$0xff]
    %v1029 = vld [vmem:[%s1015 + $0x68] sm:$0xff]
    %v1030 = vld [vmem:[%s1015 + $0x70] sm:$0xff]
    %v1031 = vld [vmem:[%s1015 + $0x78] sm:$0xff]
    %1032 = vmatprep.subr.mxu0 0.0
    %1033 = vmatpush1.msra.mxu0 %v1031
    %1034 = vmatprep.subr.mxu0 0.0
    %1035 = vmatpush1.msra.mxu0 %v1030
    %1036 = vmatprep.subr.mxu0 0.0
    %1037 = vmatpush1.msra.mxu0 %v1029
    %1038 = vmatprep.subr.mxu0 0.0
    %1039 = vmatpush1.msra.mxu0 %v1028
    %1040 = vmatprep.subr.mxu0 0.0
    %1041 = vmatpush1.msra.mxu0 %v1027
    %1042 = vmatprep.subr.mxu0 0.0
    %1043 = vmatpush1.msra.mxu0 %v1026
    %1044 = vmatprep.subr.mxu0 0.0
    %1045 = vmatpush1.msra.mxu0 %v1025
    %1046 = vmatprep.subr.mxu0 0.0
    %1047 = vmatpush1.msra.mxu0 %v1024
    %1048 = vmatprep.subr.mxu0 0.0
    %1049 = vmatpush1.msra.mxu0 %v1023
    %1050 = vmatprep.subr.mxu0 0.0
    %1051 = vmatpush1.msra.mxu0 %v1022
    %1052 = vmatprep.subr.mxu0 0.0
    %1053 = vmatpush1.msra.mxu0 %v1021
    %1054 = vmatprep.subr.mxu0 0.0
    %1055 = vmatpush1.msra.mxu0 %v1020
    %1056 = vmatprep.subr.mxu0 0.0
    %1057 = vmatpush1.msra.mxu0 %v1019
    %1058 = vmatprep.subr.mxu0 0.0
    %1059 = vmatpush1.msra.mxu0 %v1018
    %1060 = vmatprep.subr.mxu0 0.0
    %1061 = vmatpush1.msra.mxu0 %v1017
    %1062 = vmatprep.subr.mxu0 0.0
    %1063 = vmatpush1.msra.mxu0 %v1016
    %1064 = vmatprep.subr.mxu0 0.0
    %1065 = vmatpush2.msra.mxu0 0.0
    %1066 = vmatprep.subr.mxu0 0.0
    %1067 = vmatpush2.msra.mxu0 0.0
    %1068 = vmatprep.subr.mxu0 0.0
    %1069 = vmatpush2.msra.mxu0 0.0
    %1070 = vmatprep.subr.mxu0 0.0
    %1071 = vmatpush2.msra.mxu0 0.0
    %1072 = vmatprep.subr.mxu0 0.0
    %1073 = vmatpush2.msra.mxu0 0.0
    %1074 = vmatprep.subr.mxu0 0.0
    %1075 = vmatpush2.msra.mxu0 0.0
    %1076 = vmatprep.subr.mxu0 0.0
    %1077 = vmatpush2.msra.mxu0 0.0
    %1078 = vmatprep.subr.mxu0 0.0
    %1079 = vmatpush2.msra.mxu0 0.0
    %1080 = vmatprep.subr.mxu0 0.0
    %1081 = vmatpush2.msra.mxu0 0.0
    %1082 = vmatprep.subr.mxu0 0.0
    %1083 = vmatpush2.msra.mxu0 0.0
    %1084 = vmatprep.subr.mxu0 0.0
    %1085 = vmatpush2.msra.mxu0 0.0
    %1086 = vmatprep.subr.mxu0 0.0
    %1087 = vmatpush2.msra.mxu0 0.0
    %1088 = vmatprep.subr.mxu0 0.0
    %1089 = vmatpush2.msra.mxu0 0.0
    %1090 = vmatprep.subr.mxu0 0.0
    %1091 = vmatpush2.msra.mxu0 0.0
    %1092 = vmatprep.subr.mxu0 0.0
    %1093 = vmatpush2.msra.mxu0 0.0
    %1094 = vmatprep.subr.mxu0 0.0
    %1095 = vmatpush2.msra.mxu0 0.0
    %1096 = vmatprep.mubr.f32.mxu0 0.0
    %1097 = vmatmul.mubr.f32.gmra.mxu0 %v1008
    %v1098 = vpop.f32.mrf.mxu0
    %v1099 = vadd.f32 0.0, %v1098
    %v1100 = vpop.f32.mrf.mxu0
    %1101 = vmatprep.mubr.f32.mxu0 0.0
    %1102 = vmatmul.mubr.f32.gmra.mxu0 %v1009
    %v1103 = vpop.f32.mrf.mxu0
    %v1104 = vadd.f32 0.0, %v1103
    %v1105 = vpop.f32.mrf.mxu0
    %1106 = vmatprep.mubr.f32.mxu0 0.0
    %1107 = vmatmul.mubr.f32.gmra.mxu0 %v1010
    %v1108 = vpop.f32.mrf.mxu0
    %v1109 = vadd.f32 0.0, %v1108
    %v1110 = vpop.f32.mrf.mxu0
    %1111 = vmatprep.mubr.f32.mxu0 0.0
    %1112 = vmatmul.mubr.f32.gmra.mxu0 %v1011
    %v1113 = vpop.f32.mrf.mxu0
    %v1114 = vadd.f32 0.0, %v1113
    %v1115 = vpop.f32.mrf.mxu0
    %1116 = vmatprep.mubr.f32.mxu0 0.0
    %1117 = vmatmul.mubr.f32.gmra.mxu0 %v1012
    %v1118 = vpop.f32.mrf.mxu0
    %v1119 = vadd.f32 0.0, %v1118
    %v1120 = vpop.f32.mrf.mxu0
    %1121 = vmatprep.mubr.f32.mxu0 0.0
    %1122 = vmatmul.mubr.f32.gmra.mxu0 %v1013
    %v1123 = vpop.f32.mrf.mxu0
    %v1124 = vadd.f32 0.0, %v1123
    %v1125 = vpop.f32.mrf.mxu0
    %1126 = vmatprep.mubr.f32.mxu0 0.0
    %1127 = vmatmul.mubr.f32.gmra.mxu0 %v1014
    %v1128 = vpop.f32.mrf.mxu0
    %v1129 = vadd.f32 0.0, %v1128
    %v1130 = vpop.f32.mrf.mxu0
    %1131 = vdwg.mxu0
    %v1132 = vadd.f32 %v975, %v1099
    %v1133 = vadd.f32 %v980, %v1104
    %v1134 = vadd.f32 %v985, %v1109
    %v1135 = vadd.f32 %v990, %v1114
    %v1136 = vadd.f32 %v995, %v1119
    %v1137 = vadd.f32 %v1000, %v1124
    %v1138 = vadd.f32 %v1005, %v1129
    %v1139 = vld [vmem:[%s5] sm:$0x1]
    %v1140 = vld [vmem:[%s6] sm:$0x1]
    %v1141 = vmul.f32 %v1132, %v201
    %v1142 = vmul.f32 %v1133, %v202
    %v1143 = vmul.f32 %v1134, %v203
    %v1144 = vmul.f32 %v1135, %v204
    %v1145 = vmul.f32 %v1136, %v205
    %v1146 = vmul.f32 %v1137, %v206
    %v1147 = vmul.f32 %v1138, %v207
    %v1148 = vadd.f32 %v1141, %v1142
    %v1149 = vadd.f32 %v1148, %v1143
    %v1150 = vadd.f32 %v1149, %v1144
    %v1151 = vadd.f32 %v1150, %v1145
    %v1152 = vadd.f32 %v1151, %v1146
    %v1153 = vsel %vm651, %v1147, 0.0
    %v1154 = vadd.f32 %v1152, %v1153
    %v1155 = vrot.slane %v1154, 4
    %v1156 = vadd.f32 %v1154, %v1155
    %v1157 = vrot.slane %v1156, 2
    %v1158 = vadd.f32 %v1156, %v1157
    %v1159 = vrot.slane %v1158, 1
    %v1160 = vadd.f32 %v1158, %v1159
    %v1161 = vmul.f32 %v1141, %v1132
    %v1162 = vmul.f32 %v1142, %v1133
    %v1163 = vmul.f32 %v1143, %v1134
    %v1164 = vmul.f32 %v1144, %v1135
    %v1165 = vmul.f32 %v1145, %v1136
    %v1166 = vmul.f32 %v1146, %v1137
    %v1167 = vmul.f32 %v1147, %v1138
    %v1168 = vadd.f32 %v1161, %v1162
    %v1169 = vadd.f32 %v1168, %v1163
    %v1170 = vadd.f32 %v1169, %v1164
    %v1171 = vadd.f32 %v1170, %v1165
    %v1172 = vadd.f32 %v1171, %v1166
    %v1173 = vsel %vm651, %v1167, 0.0
    %v1174 = vadd.f32 %v1172, %v1173
    %v1175 = vrot.slane %v1174, 4
    %v1176 = vadd.f32 %v1174, %v1175
    %v1177 = vrot.slane %v1176, 2
    %v1178 = vadd.f32 %v1176, %v1177
    %v1179 = vrot.slane %v1178, 1
    %v1180 = vadd.f32 %v1178, %v1179
    %v1181 = vsel %vm680, %v1160, %v1180
    %1182 = vrot.lane.b32.xlu0 %v1181, 8
    %v1183 = vpop.permute.xlu0 %1182
    %v1184 = vadd.f32 %v1181, %v1183
    %1185 = vrot.lane.b32.xlu0 %v1184, 16
    %v1186 = vpop.permute.xlu0 %1185
    %v1187 = vadd.f32 %v1184, %v1186
    %1188 = vrot.lane.b32.xlu0 %v1187, 32
    %v1189 = vpop.permute.xlu0 %1188
    %v1190 = vadd.f32 %v1187, %v1189
    %1191 = vrot.lane.b32.xlu0 %v1190, 64
    %v1192 = vpop.permute.xlu0 %1191
    %v1193 = vadd.f32 %v1190, %v1192
    %v1194 = vmul.f32 %v1193, 0.001953125
    %v1195 = vmul.f32 %v1194, %v1194
    %v1197 = vrot.slane %v1195, 7
    %v1199 = vsub.f32 %v1194, %v1197
    %v1200 = vadd.f32 %v1199, 1e-05
    %v1201 = vrsqrt.pop %v1200
    %v1204 = vunpack.c.l.s4 1966171168
    %v1205 = vunpack.c.0.s8 %v1204
    %v1206 = vlaneseq
    %v1207 = vshrl.u32 %v1206, 7
    %v1208 = vsub.s32 %v1205, %v1207
    %v1209 = vrot.slane %v1201, %v1208
    %v1210 = vcombine.high %v1209, %v1209
    %v1212 = vunpack.c.l.s4 1966171168
    %v1213 = vunpack.c.0.s8 %v1212
    %v1214 = vlaneseq
    %v1215 = vshrl.u32 %v1214, 7
    %v1216 = vsub.s32 %v1213, %v1215
    %v1217 = vrot.slane %v1210, %v1216
    %v1219 = vmul.f32 %v1139, %v1217
    %v1220 = vmul.f32 %v1194, %v1219
    %v1221 = vsub.f32 %v1140, %v1220
    %v1222 = vld [vmem:[#allocation4] sm:$0xff]
    %v1223 = vld [vmem:[#allocation4 + $0x8] sm:$0xff]
    %v1224 = vld [vmem:[#allocation4 + $0x10] sm:$0xff]
    %v1225 = vld [vmem:[#allocation4 + $0x18] sm:$0xff]
    %v1226 = vld [vmem:[#allocation10] sm:$0xff]
    %v1227 = vld [vmem:[#allocation10 + $0x8] sm:$0xff]
    %v1228 = vld [vmem:[#allocation10 + $0x10] sm:$0xff]
    %v1229 = vld [vmem:[#allocation10 + $0x18] sm:$0xff]
    %v1230 = vld [vmem:[#allocation10 + $0x20] sm:$0xff]
    %v1231 = vld [vmem:[#allocation10 + $0x28] sm:$0xff]
    %v1232 = vld [vmem:[#allocation10 + $0x30] sm:$0xff]
    %v1233 = vld [vmem:[#allocation10 + $0x38] sm:$0xff]
    %v1234 = vld [vmem:[%s8] sm:$0x1]
    %v1236 = vlaneseq
    %v1237 = vshrl.u32 %v1236, 7
    %v1238 = vsub.s32 0, %v1237
    %v1239 = vrot.slane %v1234, %v1238
    %v1242 = vsel %vm208, %v1222, 0
    %v1245 = vsel %vm208, %v1223, 0
    %v1248 = vsel %vm208, %v1224, 0
    %v1251 = vsel %vm208, %v1225, 0
    %1253 = vmatprep.subr.mxu0 0.0
    %1254 = vmatpush1.msra.mxu0 0.0
    %1255 = vmatprep.subr.mxu0 0.0
    %1256 = vmatpush1.msra.mxu0 0.0
    %1257 = vmatprep.subr.mxu0 0.0
    %1258 = vmatpush1.msra.mxu0 0.0
    %1259 = vmatprep.subr.mxu0 0.0
    %1260 = vmatpush1.msra.mxu0 0.0
    %1261 = vmatprep.subr.mxu0 0.0
    %1262 = vmatpush1.msra.mxu0 0.0
    %1263 = vmatprep.subr.mxu0 0.0
    %1264 = vmatpush1.msra.mxu0 0.0
    %1265 = vmatprep.subr.mxu0 0.0
    %1266 = vmatpush1.msra.mxu0 0.0
    %1267 = vmatprep.subr.mxu0 0.0
    %1268 = vmatpush1.msra.mxu0 0.0
    %1269 = vmatprep.subr.mxu0 0.0
    %1270 = vmatpush1.msra.mxu0 %v1233
    %1271 = vmatprep.subr.mxu0 0.0
    %1272 = vmatpush1.msra.mxu0 %v1232
    %1273 = vmatprep.subr.mxu0 0.0
    %1274 = vmatpush1.msra.mxu0 %v1231
    %1275 = vmatprep.subr.mxu0 0.0
    %1276 = vmatpush1.msra.mxu0 %v1230
    %1277 = vmatprep.subr.mxu0 0.0
    %1278 = vmatpush1.msra.mxu0 %v1229
    %1279 = vmatprep.subr.mxu0 0.0
    %1280 = vmatpush1.msra.mxu0 %v1228
    %1281 = vmatprep.subr.mxu0 0.0
    %1282 = vmatpush1.msra.mxu0 %v1227
    %1283 = vmatprep.subr.mxu0 0.0
    %1284 = vmatpush1.msra.mxu0 %v1226
    %1285 = vmatprep.subr.mxu0 0.0
    %1286 = vmatpush2.msra.mxu0 0.0
    %1287 = vmatprep.subr.mxu0 0.0
    %1288 = vmatpush2.msra.mxu0 0.0
    %1289 = vmatprep.subr.mxu0 0.0
    %1290 = vmatpush2.msra.mxu0 0.0
    %1291 = vmatprep.subr.mxu0 0.0
    %1292 = vmatpush2.msra.mxu0 0.0
    %1293 = vmatprep.subr.mxu0 0.0
    %1294 = vmatpush2.msra.mxu0 0.0
    %1295 = vmatprep.subr.mxu0 0.0
    %1296 = vmatpush2.msra.mxu0 0.0
    %1297 = vmatprep.subr.mxu0 0.0
    %1298 = vmatpush2.msra.mxu0 0.0
    %1299 = vmatprep.subr.mxu0 0.0
    %1300 = vmatpush2.msra.mxu0 0.0
    %1301 = vmatprep.subr.mxu0 0.0
    %1302 = vmatpush2.msra.mxu0 0.0
    %1303 = vmatprep.subr.mxu0 0.0
    %1304 = vmatpush2.msra.mxu0 0.0
    %1305 = vmatprep.subr.mxu0 0.0
    %1306 = vmatpush2.msra.mxu0 0.0
    %1307 = vmatprep.subr.mxu0 0.0
    %1308 = vmatpush2.msra.mxu0 0.0
    %1309 = vmatprep.subr.mxu0 0.0
    %1310 = vmatpush2.msra.mxu0 0.0
    %1311 = vmatprep.subr.mxu0 0.0
    %1312 = vmatpush2.msra.mxu0 0.0
    %1313 = vmatprep.subr.mxu0 0.0
    %1314 = vmatpush2.msra.mxu0 0.0
    %1315 = vmatprep.subr.mxu0 0.0
    %1316 = vmatpush2.msra.mxu0 0.0
    %1317 = vmatprep.mubr.f32.mxu0 0.0
    %1318 = vmatmul.mubr.f32.gmra.mxu0 %v1242
    %v1319 = vpop.f32.mrf.mxu0
    %v1320 = vadd.f32 %v1239, %v1319
    %v1321 = vpop.f32.mrf.mxu0
    %1322 = vmatprep.mubr.f32.mxu0 0.0
    %1323 = vmatmul.mubr.f32.gmra.mxu0 %v1245
    %v1324 = vpop.f32.mrf.mxu0
    %v1325 = vadd.f32 %v1239, %v1324
    %v1326 = vpop.f32.mrf.mxu0
    %1327 = vmatprep.mubr.f32.mxu0 0.0
    %1328 = vmatmul.mubr.f32.gmra.mxu0 %v1248
    %v1329 = vpop.f32.mrf.mxu0
    %v1330 = vadd.f32 %v1239, %v1329
    %v1331 = vpop.f32.mrf.mxu0
    %1332 = vmatprep.mubr.f32.mxu0 0.0
    %1333 = vmatmul.mubr.f32.gmra.mxu0 %v1251
    %v1334 = vpop.f32.mrf.mxu0
    %v1335 = vadd.f32 %v1239, %v1334
    %v1336 = vpop.f32.mrf.mxu0
    %1337 = vdwg.mxu0
    %v1339 = vlaneseq
    %v1340 = vshrl.u32 %v1339, 7
    %v1341 = vsub.s32 0, %v1340
    %v1342 = vrot.slane %v1219, %v1341
    %v1344 = vmul.f32 %v1132, %v1342
    %v1345 = vmul.f32 %v1133, %v1342
    %v1346 = vmul.f32 %v1134, %v1342
    %v1348 = vlaneseq
    %v1349 = vshrl.u32 %v1348, 7
    %v1350 = vsub.s32 0, %v1349
    %v1351 = vrot.slane %v1221, %v1350
    %v1353 = vadd.f32 %v1344, %v1351
    %v1354 = vadd.f32 %v1345, %v1351
    %v1355 = vadd.f32 %v1346, %v1351
    %vm1358 = vcmask 1046528
    %v1359 = vrot.slane %v1320, 1
    %v1360 = vrot.slane %v1325, 1
    %v1361 = vsel %vm1358, %v1359, %v1360
    %v1365 = vadd.f32 %v1353, %v1359
    %v1366 = vadd.f32 %v1354, %v1361
    %v1367 = vadd.f32 %v1355, %v1360
    %v1368 = vmax.f32 %v1365, 0.0
    %v1369 = vmax.f32 %v1366, 0.0
    %v1370 = vmax.f32 %v1367, 0.0
    %1371 = vst [vmem:[#allocation12 - $0x7] sm:$0x80] %v1368
    %1372 = vst [vmem:[#allocation12 + $0x1] sm:$0xff] %v1369
    %1373 = vst [vmem:[#allocation12 + $0x9] sm:$0x7f] %v1370
    %v1374 = vmul.f32 %v1135, %v1342
    %v1375 = vmul.f32 %v1136, %v1342
    %v1376 = vmul.f32 %v1137, %v1342
    %v1377 = vadd.f32 %v1374, %v1351
    %v1378 = vadd.f32 %v1375, %v1351
    %v1379 = vadd.f32 %v1376, %v1351
    %v1382 = vrot.slane %v1330, 1
    %v1383 = vrot.slane %v1335, 1
    %v1384 = vsel %vm1358, %v1382, %v1383
    %v1388 = vadd.f32 %v1377, %v1382
    %v1389 = vadd.f32 %v1378, %v1384
    %v1390 = vadd.f32 %v1379, %v1383
    %v1391 = vmax.f32 %v1388, 0.0
    %v1392 = vmax.f32 %v1389, 0.0
    %v1393 = vmax.f32 %v1390, 0.0
    %1394 = vst [vmem:[#allocation12 + $0x9] sm:$0x80] %v1391
    %1395 = vst [vmem:[#allocation12 + $0x11] sm:$0xff] %v1392
    %1396 = vst [vmem:[#allocation12 + $0x19] sm:$0x7f] %v1393
    // Predicated region
    $region54: #{tpu_custom_call.1} parent=1 // pred_check
      _
    $region55: #{tpu_custom_call.1} parent=1 // pred_check_branch
      %1398 = sbr.rel (0) target = $region57
    $region56: #{tpu_custom_call.1} parent=1 // pred_region
      %s1400 = ssub.s32 512, 512
      %1401 = vsyncadd [#allocation6], %s1400
      %s1402 = sshll.u32 [#allocation12], 4
      %s1403 = int_to_ptr.vmem [resolvable:$true] %s1402
      %1408 = dma.vmem_to_hbm [thread:$0]  %s1403, 512, %s9, [#allocation6], 128, 128, 8
    $region57: #{tpu_custom_call.1} parent=1 // pred_fallthru
      _
    // Predicated region
    $region58: #{tpu_custom_call.1} parent=1 // pred_check
      _
    $region59: #{tpu_custom_call.1} parent=1 // pred_check_branch
      %1410 = sbr.rel (0) target = $region61
    $region60: #{tpu_custom_call.1} parent=1 // pred_region
      %1411 = dma.done [#allocation6], 512
    $region61: #{tpu_custom_call.1} parent=1 // pred_fallthru
      _
    %1412 = vsyncpa [#allocation5], 1
    %1413 = vsyncpa [#allocation8], 1
    %1414 = vsyncpa [#allocation11], 1
    %1415 = vsyncpa [#allocation6], 1

</llo_original>
